<compile_context>
chip_gen: v7x
topology: tpu7x:2x2x1
jax: 0.10.0
libtpu: 0.0.40
codegen_flags: <defaults>
</compile_context>

<pallas_src>
import functools

import jax
import jax.numpy as jnp
from jax.experimental import pallas as pl
from jax.experimental.pallas import tpu as pltpu


# ----------------------------- fused kernel --------------------------------

def _fused_lstm_fc_kernel(*refs, num_layers, T, B, H):
    """All LSTM layers (wavefront over time) + FC head in one kernel.

    Ref layout (in order):
      x_ref                     : (T*B, Din)  time-major flattened input, bf16
      per layer l (3 refs each) : wih (Din_l, 4H) bf16, whh (H, 4H) bf16,
                                  b (1, 4H) f32  (= b_ih + b_hh)
      fcw_ref                   : (H, Opad) bf16  (zero-padded columns)
      fcb_ref                   : (1, Opad) f32
      out_ref                   : (B, Opad) f32  [output]
    """
    x_ref = refs[0]
    layer_refs = refs[1:1 + 3 * num_layers]
    fcw_ref = refs[1 + 3 * num_layers]
    fcb_ref = refs[2 + 3 * num_layers]
    out_ref = refs[3 + 3 * num_layers]

    # ---- hoisted, batched input projection for layer 0 (one MXU issue) ----
    b0 = jnp.broadcast_to(layer_refs[2][...], (T * B, 4 * H))
    xp0 = jnp.dot(x_ref[...], layer_refs[0][...],
                  preferred_element_type=jnp.float32) + b0      # (T*B, 4H) f32

    # ---- per-layer weights / biases loaded & broadcast once (hoisted) ----
    whh = [layer_refs[3 * l + 1][...] for l in range(num_layers)]     # bf16
    wih_up = [layer_refs[3 * l][...] for l in range(1, num_layers)]   # bf16
    b_up = [jnp.broadcast_to(layer_refs[3 * l + 2][...], (B, 4 * H))
            for l in range(1, num_layers)]                            # f32

    def gate_update(gates, c_prev, first):
        # Full-width transcendentals on the (B, 4H) tile, then static lane
        # slices per gate (PyTorch gate order: i, f, g, o).
        sg = jax.nn.sigmoid(gates)
        th = jnp.tanh(gates)
        i_g = sg[:, 0 * H:1 * H]
        f_g = sg[:, 1 * H:2 * H]
        g_g = th[:, 2 * H:3 * H]
        o_g = sg[:, 3 * H:4 * H]
        c_new = i_g * g_g if first else f_g * c_prev + i_g * g_g
        h_new = o_g * jnp.tanh(c_new)
        return h_new, c_new

    h = [None] * num_layers
    c = [None] * num_layers

    # Wavefront: fully unrolled over (t, layer).  Layer l's step t depends on
    # layer l-1's step t and layer l's step t-1, so the per-layer serial
    # chains are independent within a "clock" and the scheduler interleaves
    # them.  No inter-layer sequence is ever stored.
    for t in range(T):                                   # static unroll
        first = (t == 0)

        # layer 0: hoisted projection slice (+ recurrent matmul when t > 0)
        g0 = xp0[t * B:(t + 1) * B, :]
        if not first:
            g0 = g0 + jnp.dot(h[0].astype(jnp.bfloat16), whh[0],
                              preferred_element_type=jnp.float32)
        h[0], c[0] = gate_update(g0, c[0], first)

        # upper layers: consume the fresh h_t from the layer below
        for l in range(1, num_layers):
            gl = jnp.dot(h[l - 1].astype(jnp.bfloat16), wih_up[l - 1],
                         preferred_element_type=jnp.float32) + b_up[l - 1]
            if not first:
                gl = gl + jnp.dot(h[l].astype(jnp.bfloat16), whh[l],
                                  preferred_element_type=jnp.float32)
            h[l], c[l] = gate_update(gl, c[l], first)

    # Fused FC head on the final hidden state; lane-dense (padded) output.
    out_ref[...] = (jnp.dot(h[num_layers - 1].astype(jnp.bfloat16),
                            fcw_ref[...],
                            preferred_element_type=jnp.float32)
                    + fcb_ref[...])


# ------------------------------- wrapper -----------------------------------

def stock_prediction_lstm(x, params):
    """x: (batch, seq, input_size) -> (batch, output_size). One fused kernel."""
    B, T, Din = x.shape
    lstm_params = params["lstm"]
    num_layers = len(lstm_params)
    H = lstm_params[0][1].shape[1]                # w_hh: (4H, H)
    fc_w, fc_b = params["fc"]                     # (O, H), (O,)
    O = fc_w.shape[0]
    Opad = max(128, ((O + 127) // 128) * 128)     # lane-dense FC output

    # Layout plumbing only (all math runs inside the Pallas kernel):
    # time-major flattened bf16 input; weights transposed once to (Din, 4H) /
    # (H, 4H) bf16; biases pre-combined; FC weight bf16 + lane-padded.
    x_flat = (jnp.transpose(x, (1, 0, 2))
              .reshape(T * B, Din)
              .astype(jnp.bfloat16))                              # (T*B, Din)

    inputs = [x_flat]
    for (w_ih, w_hh, b_ih, b_hh) in lstm_params:
        inputs.append(jnp.transpose(w_ih).astype(jnp.bfloat16))   # (Din_l, 4H)
        inputs.append(jnp.transpose(w_hh).astype(jnp.bfloat16))   # (H, 4H)
        inputs.append((b_ih + b_hh).reshape(1, 4 * H).astype(jnp.float32))
    fcw_pad = (jnp.zeros((H, Opad), jnp.float32)
               .at[:, :O].set(jnp.transpose(fc_w))
               .astype(jnp.bfloat16))
    fcb_pad = jnp.zeros((1, Opad), jnp.float32).at[:, :O].set(fc_b.reshape(1, O))
    inputs += [fcw_pad, fcb_pad]

    kernel = functools.partial(_fused_lstm_fc_kernel,
                               num_layers=num_layers, T=T, B=B, H=H)
    vmem_spec = pl.BlockSpec(memory_space=pltpu.MemorySpace.VMEM)
    out_pad = pl.pallas_call(
        kernel,
        out_shape=jax.ShapeDtypeStruct((B, Opad), jnp.float32),
        in_specs=[vmem_spec] * len(inputs),
        out_specs=vmem_spec,
    )(*inputs)
    return out_pad[:, :O]


# ------------------------- deterministic params ----------------------------

def init_params(key, input_size, hidden_size, num_layers, output_size):
    scale = 1.0 / jnp.sqrt(hidden_size)
    params = {"lstm": []}
    for layer in range(num_layers):
        d_in = input_size if layer == 0 else hidden_size
        key, k1, k2, k3, k4 = jax.random.split(key, 5)
        w_ih = jax.random.uniform(k1, (4 * hidden_size, d_in),
                                  minval=-scale, maxval=scale)
        w_hh = jax.random.uniform(k2, (4 * hidden_size, hidden_size),
                                  minval=-scale, maxval=scale)
        b_ih = jax.random.uniform(k3, (4 * hidden_size,),
                                  minval=-scale, maxval=scale)
        b_hh = jax.random.uniform(k4, (4 * hidden_size,),
                                  minval=-scale, maxval=scale)
        params["lstm"].append((w_ih, w_hh, b_ih, b_hh))
    key, k5, k6 = jax.random.split(key, 3)
    fc_w = jax.random.uniform(k5, (output_size, hidden_size),
                              minval=-scale, maxval=scale)
    fc_b = jax.random.uniform(k6, (output_size,),
                              minval=-scale, maxval=scale)
    params["fc"] = (fc_w, fc_b)
    return params


# ------------------------------ pure-JAX ref -------------------------------

def reference_forward(x, params):
    h_seq = x.astype(jnp.float32)
    B = x.shape[0]
    for (w_ih, w_hh, b_ih, b_hh) in params["lstm"]:
        H = w_hh.shape[1]
        h = jnp.zeros((B, H), jnp.float32)
        c = jnp.zeros((B, H), jnp.float32)
        outs = []
        for t in range(h_seq.shape[1]):
            gates = h_seq[:, t, :] @ w_ih.T + b_ih + h @ w_hh.T + b_hh
            i_g = jax.nn.sigmoid(gates[:, 0 * H:1 * H])
            f_g = jax.nn.sigmoid(gates[:, 1 * H:2 * H])
            g_g = jnp.tanh(gates[:, 2 * H:3 * H])
            o_g = jax.nn.sigmoid(gates[:, 3 * H:4 * H])
            c = f_g * c + i_g * g_g
            h = o_g * jnp.tanh(c)
            outs.append(h)
        h_seq = jnp.stack(outs, axis=1)
    fc_w, fc_b = params["fc"]
    return h_seq[:, -1, :] @ fc_w.T + fc_b


# ---------------------------------- main -----------------------------------

if __name__ == "__main__":
    batch, seq, input_size = 2, 8, 4
    hidden_size, num_layers, output_size = 32, 2, 1

    key = jax.random.PRNGKey(0)
    key, kx = jax.random.split(key)
    x = jax.random.normal(kx, (batch, seq, input_size), dtype=jnp.float32)
    params = init_params(key, input_size, hidden_size, num_layers, output_size)

    out = stock_prediction_lstm(x, params)
    out = jax.block_until_ready(out)

    ref = reference_forward(x, params)
    assert out.shape == (batch, output_size)
    # bf16 MXU inputs with f32 accumulation -> loosened (but still tight)
    # tolerance versus the all-f32 reference.
    max_err = float(jnp.max(jnp.abs(out - ref)))
    assert jnp.allclose(out, ref, rtol=2e-2, atol=2e-2), (out, ref, max_err)

    print("KERNEL_OK")
</pallas_src>

<mosaic_0001>
module attributes {stable_mosaic.version = 11 : i64} {
  func.func @_fused_lstm_fc_kernel(%arg0: memref<16x4xbf16, #tpu.memory_space<vmem>>, %arg1: memref<4x128xbf16, #tpu.memory_space<vmem>>, %arg2: memref<32x128xbf16, #tpu.memory_space<vmem>>, %arg3: memref<1x128xf32, #tpu.memory_space<vmem>>, %arg4: memref<32x128xbf16, #tpu.memory_space<vmem>>, %arg5: memref<32x128xbf16, #tpu.memory_space<vmem>>, %arg6: memref<1x128xf32, #tpu.memory_space<vmem>>, %arg7: memref<32x128xbf16, #tpu.memory_space<vmem>>, %arg8: memref<1x128xf32, #tpu.memory_space<vmem>>, %arg9: memref<2x128xf32, #tpu.memory_space<vmem>>) attributes {dimension_semantics = [], scalar_prefetch = 0 : i64, scratch_operands = 0 : i64, tpu.core_type = #tpu.core_type<tc>} {
    %c0 = arith.constant 0 : index
    %c0_0 = arith.constant 0 : index
    %0 = vector.load %arg3[%c0, %c0_0] : memref<1x128xf32, #tpu.memory_space<vmem>>, vector<1x128xf32>
    %1 = vector.shape_cast %0 : vector<1x128xf32> to vector<1x128xf32>
    %2 = vector.broadcast %1 : vector<1x128xf32> to vector<16x128xf32>
    %c0_1 = arith.constant 0 : index
    %c0_2 = arith.constant 0 : index
    %3 = vector.load %arg0[%c0_1, %c0_2] : memref<16x4xbf16, #tpu.memory_space<vmem>>, vector<16x4xbf16>
    %c0_3 = arith.constant 0 : index
    %c0_4 = arith.constant 0 : index
    %4 = vector.load %arg1[%c0_3, %c0_4] : memref<4x128xbf16, #tpu.memory_space<vmem>>, vector<4x128xbf16>
    %cst = arith.constant dense<0.000000e+00> : vector<16x128xf32>
    %5 = tpu.matmul %3, %4, %cst {dimension_numbers = #tpu.dot_dimension_numbers<[1], [0], [0], [1], [0, 0, 1, 1], [], []>} : vector<16x4xbf16>, vector<4x128xbf16>, vector<16x128xf32> -> vector<16x128xf32>
    %6 = arith.addf %5, %2 : vector<16x128xf32>
    %c0_5 = arith.constant 0 : index
    %c0_6 = arith.constant 0 : index
    %7 = vector.load %arg2[%c0_5, %c0_6] : memref<32x128xbf16, #tpu.memory_space<vmem>>, vector<32x128xbf16>
    %c0_7 = arith.constant 0 : index
    %c0_8 = arith.constant 0 : index
    %8 = vector.load %arg5[%c0_7, %c0_8] : memref<32x128xbf16, #tpu.memory_space<vmem>>, vector<32x128xbf16>
    %c0_9 = arith.constant 0 : index
    %c0_10 = arith.constant 0 : index
    %9 = vector.load %arg4[%c0_9, %c0_10] : memref<32x128xbf16, #tpu.memory_space<vmem>>, vector<32x128xbf16>
    %c0_11 = arith.constant 0 : index
    %c0_12 = arith.constant 0 : index
    %10 = vector.load %arg6[%c0_11, %c0_12] : memref<1x128xf32, #tpu.memory_space<vmem>>, vector<1x128xf32>
    %11 = vector.shape_cast %10 : vector<1x128xf32> to vector<1x128xf32>
    %12 = vector.broadcast %11 : vector<1x128xf32> to vector<2x128xf32>
    %13 = vector.extract_strided_slice %6 {offsets = [0, 0], sizes = [2, 128], strides = [1, 1]} : vector<16x128xf32> to vector<2x128xf32>
    %14 = arith.negf %13 : vector<2x128xf32>
    %15 = math.exp %14 : vector<2x128xf32>
    %cst_13 = arith.constant 1.000000e+00 : f32
    %16 = vector.broadcast %cst_13 : f32 to vector<2x128xf32>
    %17 = arith.addf %16, %15 : vector<2x128xf32>
    %18 = arith.divf %16, %17 : vector<2x128xf32>
    %19 = math.tanh %13 : vector<2x128xf32>
    %20 = vector.extract_strided_slice %18 {offsets = [0, 0], sizes = [2, 32], strides = [1, 1]} : vector<2x128xf32> to vector<2x32xf32>
    %21 = vector.extract_strided_slice %19 {offsets = [0, 64], sizes = [2, 32], strides = [1, 1]} : vector<2x128xf32> to vector<2x32xf32>
    %22 = vector.extract_strided_slice %18 {offsets = [0, 96], sizes = [2, 32], strides = [1, 1]} : vector<2x128xf32> to vector<2x32xf32>
    %23 = arith.mulf %20, %21 : vector<2x32xf32>
    %24 = math.tanh %23 : vector<2x32xf32>
    %25 = arith.mulf %22, %24 : vector<2x32xf32>
    %26 = arith.truncf %25 : vector<2x32xf32> to vector<2x32xbf16>
    %cst_14 = arith.constant dense<0.000000e+00> : vector<2x128xf32>
    %27 = tpu.matmul %26, %9, %cst_14 {dimension_numbers = #tpu.dot_dimension_numbers<[1], [0], [0], [1], [0, 0, 1, 1], [], []>} : vector<2x32xbf16>, vector<32x128xbf16>, vector<2x128xf32> -> vector<2x128xf32>
    %28 = arith.addf %27, %12 : vector<2x128xf32>
    %29 = arith.negf %28 : vector<2x128xf32>
    %30 = math.exp %29 : vector<2x128xf32>
    %cst_15 = arith.constant 1.000000e+00 : f32
    %31 = vector.broadcast %cst_15 : f32 to vector<2x128xf32>
    %32 = arith.addf %31, %30 : vector<2x128xf32>
    %33 = arith.divf %31, %32 : vector<2x128xf32>
    %34 = math.tanh %28 : vector<2x128xf32>
    %35 = vector.extract_strided_slice %33 {offsets = [0, 0], sizes = [2, 32], strides = [1, 1]} : vector<2x128xf32> to vector<2x32xf32>
    %36 = vector.extract_strided_slice %34 {offsets = [0, 64], sizes = [2, 32], strides = [1, 1]} : vector<2x128xf32> to vector<2x32xf32>
    %37 = vector.extract_strided_slice %33 {offsets = [0, 96], sizes = [2, 32], strides = [1, 1]} : vector<2x128xf32> to vector<2x32xf32>
    %38 = arith.mulf %35, %36 : vector<2x32xf32>
    %39 = math.tanh %38 : vector<2x32xf32>
    %40 = arith.mulf %37, %39 : vector<2x32xf32>
    %41 = vector.extract_strided_slice %6 {offsets = [2, 0], sizes = [2, 128], strides = [1, 1]} : vector<16x128xf32> to vector<2x128xf32>
    %42 = arith.truncf %25 : vector<2x32xf32> to vector<2x32xbf16>
    %cst_16 = arith.constant dense<0.000000e+00> : vector<2x128xf32>
    %43 = tpu.matmul %42, %7, %cst_16 {dimension_numbers = #tpu.dot_dimension_numbers<[1], [0], [0], [1], [0, 0, 1, 1], [], []>} : vector<2x32xbf16>, vector<32x128xbf16>, vector<2x128xf32> -> vector<2x128xf32>
    %44 = arith.addf %41, %43 : vector<2x128xf32>
    %45 = arith.negf %44 : vector<2x128xf32>
    %46 = math.exp %45 : vector<2x128xf32>
    %cst_17 = arith.constant 1.000000e+00 : f32
    %47 = vector.broadcast %cst_17 : f32 to vector<2x128xf32>
    %48 = arith.addf %47, %46 : vector<2x128xf32>
    %49 = arith.divf %47, %48 : vector<2x128xf32>
    %50 = math.tanh %44 : vector<2x128xf32>
    %51 = vector.extract_strided_slice %49 {offsets = [0, 0], sizes = [2, 32], strides = [1, 1]} : vector<2x128xf32> to vector<2x32xf32>
    %52 = vector.extract_strided_slice %49 {offsets = [0, 32], sizes = [2, 32], strides = [1, 1]} : vector<2x128xf32> to vector<2x32xf32>
    %53 = vector.extract_strided_slice %50 {offsets = [0, 64], sizes = [2, 32], strides = [1, 1]} : vector<2x128xf32> to vector<2x32xf32>
    %54 = vector.extract_strided_slice %49 {offsets = [0, 96], sizes = [2, 32], strides = [1, 1]} : vector<2x128xf32> to vector<2x32xf32>
    %55 = arith.mulf %52, %23 : vector<2x32xf32>
    %56 = arith.mulf %51, %53 : vector<2x32xf32>
    %57 = arith.addf %55, %56 : vector<2x32xf32>
    %58 = math.tanh %57 : vector<2x32xf32>
    %59 = arith.mulf %54, %58 : vector<2x32xf32>
    %60 = arith.truncf %59 : vector<2x32xf32> to vector<2x32xbf16>
    %cst_18 = arith.constant dense<0.000000e+00> : vector<2x128xf32>
    %61 = tpu.matmul %60, %9, %cst_18 {dimension_numbers = #tpu.dot_dimension_numbers<[1], [0], [0], [1], [0, 0, 1, 1], [], []>} : vector<2x32xbf16>, vector<32x128xbf16>, vector<2x128xf32> -> vector<2x128xf32>
    %62 = arith.addf %61, %12 : vector<2x128xf32>
    %63 = arith.truncf %40 : vector<2x32xf32> to vector<2x32xbf16>
    %cst_19 = arith.constant dense<0.000000e+00> : vector<2x128xf32>
    %64 = tpu.matmul %63, %8, %cst_19 {dimension_numbers = #tpu.dot_dimension_numbers<[1], [0], [0], [1], [0, 0, 1, 1], [], []>} : vector<2x32xbf16>, vector<32x128xbf16>, vector<2x128xf32> -> vector<2x128xf32>
    %65 = arith.addf %62, %64 : vector<2x128xf32>
    %66 = arith.negf %65 : vector<2x128xf32>
    %67 = math.exp %66 : vector<2x128xf32>
    %cst_20 = arith.constant 1.000000e+00 : f32
    %68 = vector.broadcast %cst_20 : f32 to vector<2x128xf32>
    %69 = arith.addf %68, %67 : vector<2x128xf32>
    %70 = arith.divf %68, %69 : vector<2x128xf32>
    %71 = math.tanh %65 : vector<2x128xf32>
    %72 = vector.extract_strided_slice %70 {offsets = [0, 0], sizes = [2, 32], strides = [1, 1]} : vector<2x128xf32> to vector<2x32xf32>
    %73 = vector.extract_strided_slice %70 {offsets = [0, 32], sizes = [2, 32], strides = [1, 1]} : vector<2x128xf32> to vector<2x32xf32>
    %74 = vector.extract_strided_slice %71 {offsets = [0, 64], sizes = [2, 32], strides = [1, 1]} : vector<2x128xf32> to vector<2x32xf32>
    %75 = vector.extract_strided_slice %70 {offsets = [0, 96], sizes = [2, 32], strides = [1, 1]} : vector<2x128xf32> to vector<2x32xf32>
    %76 = arith.mulf %73, %38 : vector<2x32xf32>
    %77 = arith.mulf %72, %74 : vector<2x32xf32>
    %78 = arith.addf %76, %77 : vector<2x32xf32>
    %79 = math.tanh %78 : vector<2x32xf32>
    %80 = arith.mulf %75, %79 : vector<2x32xf32>
    %81 = vector.extract_strided_slice %6 {offsets = [4, 0], sizes = [2, 128], strides = [1, 1]} : vector<16x128xf32> to vector<2x128xf32>
    %82 = arith.truncf %59 : vector<2x32xf32> to vector<2x32xbf16>
    %cst_21 = arith.constant dense<0.000000e+00> : vector<2x128xf32>
    %83 = tpu.matmul %82, %7, %cst_21 {dimension_numbers = #tpu.dot_dimension_numbers<[1], [0], [0], [1], [0, 0, 1, 1], [], []>} : vector<2x32xbf16>, vector<32x128xbf16>, vector<2x128xf32> -> vector<2x128xf32>
    %84 = arith.addf %81, %83 : vector<2x128xf32>
    %85 = arith.negf %84 : vector<2x128xf32>
    %86 = math.exp %85 : vector<2x128xf32>
    %cst_22 = arith.constant 1.000000e+00 : f32
    %87 = vector.broadcast %cst_22 : f32 to vector<2x128xf32>
    %88 = arith.addf %87, %86 : vector<2x128xf32>
    %89 = arith.divf %87, %88 : vector<2x128xf32>
    %90 = math.tanh %84 : vector<2x128xf32>
    %91 = vector.extract_strided_slice %89 {offsets = [0, 0], sizes = [2, 32], strides = [1, 1]} : vector<2x128xf32> to vector<2x32xf32>
    %92 = vector.extract_strided_slice %89 {offsets = [0, 32], sizes = [2, 32], strides = [1, 1]} : vector<2x128xf32> to vector<2x32xf32>
    %93 = vector.extract_strided_slice %90 {offsets = [0, 64], sizes = [2, 32], strides = [1, 1]} : vector<2x128xf32> to vector<2x32xf32>
    %94 = vector.extract_strided_slice %89 {offsets = [0, 96], sizes = [2, 32], strides = [1, 1]} : vector<2x128xf32> to vector<2x32xf32>
    %95 = arith.mulf %92, %57 : vector<2x32xf32>
    %96 = arith.mulf %91, %93 : vector<2x32xf32>
    %97 = arith.addf %95, %96 : vector<2x32xf32>
    %98 = math.tanh %97 : vector<2x32xf32>
    %99 = arith.mulf %94, %98 : vector<2x32xf32>
    %100 = arith.truncf %99 : vector<2x32xf32> to vector<2x32xbf16>
    %cst_23 = arith.constant dense<0.000000e+00> : vector<2x128xf32>
    %101 = tpu.matmul %100, %9, %cst_23 {dimension_numbers = #tpu.dot_dimension_numbers<[1], [0], [0], [1], [0, 0, 1, 1], [], []>} : vector<2x32xbf16>, vector<32x128xbf16>, vector<2x128xf32> -> vector<2x128xf32>
    %102 = arith.addf %101, %12 : vector<2x128xf32>
    %103 = arith.truncf %80 : vector<2x32xf32> to vector<2x32xbf16>
    %cst_24 = arith.constant dense<0.000000e+00> : vector<2x128xf32>
    %104 = tpu.matmul %103, %8, %cst_24 {dimension_numbers = #tpu.dot_dimension_numbers<[1], [0], [0], [1], [0, 0, 1, 1], [], []>} : vector<2x32xbf16>, vector<32x128xbf16>, vector<2x128xf32> -> vector<2x128xf32>
    %105 = arith.addf %102, %104 : vector<2x128xf32>
    %106 = arith.negf %105 : vector<2x128xf32>
    %107 = math.exp %106 : vector<2x128xf32>
    %cst_25 = arith.constant 1.000000e+00 : f32
    %108 = vector.broadcast %cst_25 : f32 to vector<2x128xf32>
    %109 = arith.addf %108, %107 : vector<2x128xf32>
    %110 = arith.divf %108, %109 : vector<2x128xf32>
    %111 = math.tanh %105 : vector<2x128xf32>
    %112 = vector.extract_strided_slice %110 {offsets = [0, 0], sizes = [2, 32], strides = [1, 1]} : vector<2x128xf32> to vector<2x32xf32>
    %113 = vector.extract_strided_slice %110 {offsets = [0, 32], sizes = [2, 32], strides = [1, 1]} : vector<2x128xf32> to vector<2x32xf32>
    %114 = vector.extract_strided_slice %111 {offsets = [0, 64], sizes = [2, 32], strides = [1, 1]} : vector<2x128xf32> to vector<2x32xf32>
    %115 = vector.extract_strided_slice %110 {offsets = [0, 96], sizes = [2, 32], strides = [1, 1]} : vector<2x128xf32> to vector<2x32xf32>
    %116 = arith.mulf %113, %78 : vector<2x32xf32>
    %117 = arith.mulf %112, %114 : vector<2x32xf32>
    %118 = arith.addf %116, %117 : vector<2x32xf32>
    %119 = math.tanh %118 : vector<2x32xf32>
    %120 = arith.mulf %115, %119 : vector<2x32xf32>
    %121 = vector.extract_strided_slice %6 {offsets = [6, 0], sizes = [2, 128], strides = [1, 1]} : vector<16x128xf32> to vector<2x128xf32>
    %122 = arith.truncf %99 : vector<2x32xf32> to vector<2x32xbf16>
    %cst_26 = arith.constant dense<0.000000e+00> : vector<2x128xf32>
    %123 = tpu.matmul %122, %7, %cst_26 {dimension_numbers = #tpu.dot_dimension_numbers<[1], [0], [0], [1], [0, 0, 1, 1], [], []>} : vector<2x32xbf16>, vector<32x128xbf16>, vector<2x128xf32> -> vector<2x128xf32>
    %124 = arith.addf %121, %123 : vector<2x128xf32>
    %125 = arith.negf %124 : vector<2x128xf32>
    %126 = math.exp %125 : vector<2x128xf32>
    %cst_27 = arith.constant 1.000000e+00 : f32
    %127 = vector.broadcast %cst_27 : f32 to vector<2x128xf32>
    %128 = arith.addf %127, %126 : vector<2x128xf32>
    %129 = arith.divf %127, %128 : vector<2x128xf32>
    %130 = math.tanh %124 : vector<2x128xf32>
    %131 = vector.extract_strided_slice %129 {offsets = [0, 0], sizes = [2, 32], strides = [1, 1]} : vector<2x128xf32> to vector<2x32xf32>
    %132 = vector.extract_strided_slice %129 {offsets = [0, 32], sizes = [2, 32], strides = [1, 1]} : vector<2x128xf32> to vector<2x32xf32>
    %133 = vector.extract_strided_slice %130 {offsets = [0, 64], sizes = [2, 32], strides = [1, 1]} : vector<2x128xf32> to vector<2x32xf32>
    %134 = vector.extract_strided_slice %129 {offsets = [0, 96], sizes = [2, 32], strides = [1, 1]} : vector<2x128xf32> to vector<2x32xf32>
    %135 = arith.mulf %132, %97 : vector<2x32xf32>
    %136 = arith.mulf %131, %133 : vector<2x32xf32>
    %137 = arith.addf %135, %136 : vector<2x32xf32>
    %138 = math.tanh %137 : vector<2x32xf32>
    %139 = arith.mulf %134, %138 : vector<2x32xf32>
    %140 = arith.truncf %139 : vector<2x32xf32> to vector<2x32xbf16>
    %cst_28 = arith.constant dense<0.000000e+00> : vector<2x128xf32>
    %141 = tpu.matmul %140, %9, %cst_28 {dimension_numbers = #tpu.dot_dimension_numbers<[1], [0], [0], [1], [0, 0, 1, 1], [], []>} : vector<2x32xbf16>, vector<32x128xbf16>, vector<2x128xf32> -> vector<2x128xf32>
    %142 = arith.addf %141, %12 : vector<2x128xf32>
    %143 = arith.truncf %120 : vector<2x32xf32> to vector<2x32xbf16>
    %cst_29 = arith.constant dense<0.000000e+00> : vector<2x128xf32>
    %144 = tpu.matmul %143, %8, %cst_29 {dimension_numbers = #tpu.dot_dimension_numbers<[1], [0], [0], [1], [0, 0, 1, 1], [], []>} : vector<2x32xbf16>, vector<32x128xbf16>, vector<2x128xf32> -> vector<2x128xf32>
    %145 = arith.addf %142, %144 : vector<2x128xf32>
    %146 = arith.negf %145 : vector<2x128xf32>
    %147 = math.exp %146 : vector<2x128xf32>
    %cst_30 = arith.constant 1.000000e+00 : f32
    %148 = vector.broadcast %cst_30 : f32 to vector<2x128xf32>
    %149 = arith.addf %148, %147 : vector<2x128xf32>
    %150 = arith.divf %148, %149 : vector<2x128xf32>
    %151 = math.tanh %145 : vector<2x128xf32>
    %152 = vector.extract_strided_slice %150 {offsets = [0, 0], sizes = [2, 32], strides = [1, 1]} : vector<2x128xf32> to vector<2x32xf32>
    %153 = vector.extract_strided_slice %150 {offsets = [0, 32], sizes = [2, 32], strides = [1, 1]} : vector<2x128xf32> to vector<2x32xf32>
    %154 = vector.extract_strided_slice %151 {offsets = [0, 64], sizes = [2, 32], strides = [1, 1]} : vector<2x128xf32> to vector<2x32xf32>
    %155 = vector.extract_strided_slice %150 {offsets = [0, 96], sizes = [2, 32], strides = [1, 1]} : vector<2x128xf32> to vector<2x32xf32>
    %156 = arith.mulf %153, %118 : vector<2x32xf32>
    %157 = arith.mulf %152, %154 : vector<2x32xf32>
    %158 = arith.addf %156, %157 : vector<2x32xf32>
    %159 = math.tanh %158 : vector<2x32xf32>
    %160 = arith.mulf %155, %159 : vector<2x32xf32>
    %161 = vector.extract_strided_slice %6 {offsets = [8, 0], sizes = [2, 128], strides = [1, 1]} : vector<16x128xf32> to vector<2x128xf32>
    %162 = arith.truncf %139 : vector<2x32xf32> to vector<2x32xbf16>
    %cst_31 = arith.constant dense<0.000000e+00> : vector<2x128xf32>
    %163 = tpu.matmul %162, %7, %cst_31 {dimension_numbers = #tpu.dot_dimension_numbers<[1], [0], [0], [1], [0, 0, 1, 1], [], []>} : vector<2x32xbf16>, vector<32x128xbf16>, vector<2x128xf32> -> vector<2x128xf32>
    %164 = arith.addf %161, %163 : vector<2x128xf32>
    %165 = arith.negf %164 : vector<2x128xf32>
    %166 = math.exp %165 : vector<2x128xf32>
    %cst_32 = arith.constant 1.000000e+00 : f32
    %167 = vector.broadcast %cst_32 : f32 to vector<2x128xf32>
    %168 = arith.addf %167, %166 : vector<2x128xf32>
    %169 = arith.divf %167, %168 : vector<2x128xf32>
    %170 = math.tanh %164 : vector<2x128xf32>
    %171 = vector.extract_strided_slice %169 {offsets = [0, 0], sizes = [2, 32], strides = [1, 1]} : vector<2x128xf32> to vector<2x32xf32>
    %172 = vector.extract_strided_slice %169 {offsets = [0, 32], sizes = [2, 32], strides = [1, 1]} : vector<2x128xf32> to vector<2x32xf32>
    %173 = vector.extract_strided_slice %170 {offsets = [0, 64], sizes = [2, 32], strides = [1, 1]} : vector<2x128xf32> to vector<2x32xf32>
    %174 = vector.extract_strided_slice %169 {offsets = [0, 96], sizes = [2, 32], strides = [1, 1]} : vector<2x128xf32> to vector<2x32xf32>
    %175 = arith.mulf %172, %137 : vector<2x32xf32>
    %176 = arith.mulf %171, %173 : vector<2x32xf32>
    %177 = arith.addf %175, %176 : vector<2x32xf32>
    %178 = math.tanh %177 : vector<2x32xf32>
    %179 = arith.mulf %174, %178 : vector<2x32xf32>
    %180 = arith.truncf %179 : vector<2x32xf32> to vector<2x32xbf16>
    %cst_33 = arith.constant dense<0.000000e+00> : vector<2x128xf32>
    %181 = tpu.matmul %180, %9, %cst_33 {dimension_numbers = #tpu.dot_dimension_numbers<[1], [0], [0], [1], [0, 0, 1, 1], [], []>} : vector<2x32xbf16>, vector<32x128xbf16>, vector<2x128xf32> -> vector<2x128xf32>
    %182 = arith.addf %181, %12 : vector<2x128xf32>
    %183 = arith.truncf %160 : vector<2x32xf32> to vector<2x32xbf16>
    %cst_34 = arith.constant dense<0.000000e+00> : vector<2x128xf32>
    %184 = tpu.matmul %183, %8, %cst_34 {dimension_numbers = #tpu.dot_dimension_numbers<[1], [0], [0], [1], [0, 0, 1, 1], [], []>} : vector<2x32xbf16>, vector<32x128xbf16>, vector<2x128xf32> -> vector<2x128xf32>
    %185 = arith.addf %182, %184 : vector<2x128xf32>
    %186 = arith.negf %185 : vector<2x128xf32>
    %187 = math.exp %186 : vector<2x128xf32>
    %cst_35 = arith.constant 1.000000e+00 : f32
    %188 = vector.broadcast %cst_35 : f32 to vector<2x128xf32>
    %189 = arith.addf %188, %187 : vector<2x128xf32>
    %190 = arith.divf %188, %189 : vector<2x128xf32>
    %191 = math.tanh %185 : vector<2x128xf32>
    %192 = vector.extract_strided_slice %190 {offsets = [0, 0], sizes = [2, 32], strides = [1, 1]} : vector<2x128xf32> to vector<2x32xf32>
    %193 = vector.extract_strided_slice %190 {offsets = [0, 32], sizes = [2, 32], strides = [1, 1]} : vector<2x128xf32> to vector<2x32xf32>
    %194 = vector.extract_strided_slice %191 {offsets = [0, 64], sizes = [2, 32], strides = [1, 1]} : vector<2x128xf32> to vector<2x32xf32>
    %195 = vector.extract_strided_slice %190 {offsets = [0, 96], sizes = [2, 32], strides = [1, 1]} : vector<2x128xf32> to vector<2x32xf32>
    %196 = arith.mulf %193, %158 : vector<2x32xf32>
    %197 = arith.mulf %192, %194 : vector<2x32xf32>
    %198 = arith.addf %196, %197 : vector<2x32xf32>
    %199 = math.tanh %198 : vector<2x32xf32>
    %200 = arith.mulf %195, %199 : vector<2x32xf32>
    %201 = vector.extract_strided_slice %6 {offsets = [10, 0], sizes = [2, 128], strides = [1, 1]} : vector<16x128xf32> to vector<2x128xf32>
    %202 = arith.truncf %179 : vector<2x32xf32> to vector<2x32xbf16>
    %cst_36 = arith.constant dense<0.000000e+00> : vector<2x128xf32>
    %203 = tpu.matmul %202, %7, %cst_36 {dimension_numbers = #tpu.dot_dimension_numbers<[1], [0], [0], [1], [0, 0, 1, 1], [], []>} : vector<2x32xbf16>, vector<32x128xbf16>, vector<2x128xf32> -> vector<2x128xf32>
    %204 = arith.addf %201, %203 : vector<2x128xf32>
    %205 = arith.negf %204 : vector<2x128xf32>
    %206 = math.exp %205 : vector<2x128xf32>
    %cst_37 = arith.constant 1.000000e+00 : f32
    %207 = vector.broadcast %cst_37 : f32 to vector<2x128xf32>
    %208 = arith.addf %207, %206 : vector<2x128xf32>
    %209 = arith.divf %207, %208 : vector<2x128xf32>
    %210 = math.tanh %204 : vector<2x128xf32>
    %211 = vector.extract_strided_slice %209 {offsets = [0, 0], sizes = [2, 32], strides = [1, 1]} : vector<2x128xf32> to vector<2x32xf32>
    %212 = vector.extract_strided_slice %209 {offsets = [0, 32], sizes = [2, 32], strides = [1, 1]} : vector<2x128xf32> to vector<2x32xf32>
    %213 = vector.extract_strided_slice %210 {offsets = [0, 64], sizes = [2, 32], strides = [1, 1]} : vector<2x128xf32> to vector<2x32xf32>
    %214 = vector.extract_strided_slice %209 {offsets = [0, 96], sizes = [2, 32], strides = [1, 1]} : vector<2x128xf32> to vector<2x32xf32>
    %215 = arith.mulf %212, %177 : vector<2x32xf32>
    %216 = arith.mulf %211, %213 : vector<2x32xf32>
    %217 = arith.addf %215, %216 : vector<2x32xf32>
    %218 = math.tanh %217 : vector<2x32xf32>
    %219 = arith.mulf %214, %218 : vector<2x32xf32>
    %220 = arith.truncf %219 : vector<2x32xf32> to vector<2x32xbf16>
    %cst_38 = arith.constant dense<0.000000e+00> : vector<2x128xf32>
    %221 = tpu.matmul %220, %9, %cst_38 {dimension_numbers = #tpu.dot_dimension_numbers<[1], [0], [0], [1], [0, 0, 1, 1], [], []>} : vector<2x32xbf16>, vector<32x128xbf16>, vector<2x128xf32> -> vector<2x128xf32>
    %222 = arith.addf %221, %12 : vector<2x128xf32>
    %223 = arith.truncf %200 : vector<2x32xf32> to vector<2x32xbf16>
    %cst_39 = arith.constant dense<0.000000e+00> : vector<2x128xf32>
    %224 = tpu.matmul %223, %8, %cst_39 {dimension_numbers = #tpu.dot_dimension_numbers<[1], [0], [0], [1], [0, 0, 1, 1], [], []>} : vector<2x32xbf16>, vector<32x128xbf16>, vector<2x128xf32> -> vector<2x128xf32>
    %225 = arith.addf %222, %224 : vector<2x128xf32>
    %226 = arith.negf %225 : vector<2x128xf32>
    %227 = math.exp %226 : vector<2x128xf32>
    %cst_40 = arith.constant 1.000000e+00 : f32
    %228 = vector.broadcast %cst_40 : f32 to vector<2x128xf32>
    %229 = arith.addf %228, %227 : vector<2x128xf32>
    %230 = arith.divf %228, %229 : vector<2x128xf32>
    %231 = math.tanh %225 : vector<2x128xf32>
    %232 = vector.extract_strided_slice %230 {offsets = [0, 0], sizes = [2, 32], strides = [1, 1]} : vector<2x128xf32> to vector<2x32xf32>
    %233 = vector.extract_strided_slice %230 {offsets = [0, 32], sizes = [2, 32], strides = [1, 1]} : vector<2x128xf32> to vector<2x32xf32>
    %234 = vector.extract_strided_slice %231 {offsets = [0, 64], sizes = [2, 32], strides = [1, 1]} : vector<2x128xf32> to vector<2x32xf32>
    %235 = vector.extract_strided_slice %230 {offsets = [0, 96], sizes = [2, 32], strides = [1, 1]} : vector<2x128xf32> to vector<2x32xf32>
    %236 = arith.mulf %233, %198 : vector<2x32xf32>
    %237 = arith.mulf %232, %234 : vector<2x32xf32>
    %238 = arith.addf %236, %237 : vector<2x32xf32>
    %239 = math.tanh %238 : vector<2x32xf32>
    %240 = arith.mulf %235, %239 : vector<2x32xf32>
    %241 = vector.extract_strided_slice %6 {offsets = [12, 0], sizes = [2, 128], strides = [1, 1]} : vector<16x128xf32> to vector<2x128xf32>
    %242 = arith.truncf %219 : vector<2x32xf32> to vector<2x32xbf16>
    %cst_41 = arith.constant dense<0.000000e+00> : vector<2x128xf32>
    %243 = tpu.matmul %242, %7, %cst_41 {dimension_numbers = #tpu.dot_dimension_numbers<[1], [0], [0], [1], [0, 0, 1, 1], [], []>} : vector<2x32xbf16>, vector<32x128xbf16>, vector<2x128xf32> -> vector<2x128xf32>
    %244 = arith.addf %241, %243 : vector<2x128xf32>
    %245 = arith.negf %244 : vector<2x128xf32>
    %246 = math.exp %245 : vector<2x128xf32>
    %cst_42 = arith.constant 1.000000e+00 : f32
    %247 = vector.broadcast %cst_42 : f32 to vector<2x128xf32>
    %248 = arith.addf %247, %246 : vector<2x128xf32>
    %249 = arith.divf %247, %248 : vector<2x128xf32>
    %250 = math.tanh %244 : vector<2x128xf32>
    %251 = vector.extract_strided_slice %249 {offsets = [0, 0], sizes = [2, 32], strides = [1, 1]} : vector<2x128xf32> to vector<2x32xf32>
    %252 = vector.extract_strided_slice %249 {offsets = [0, 32], sizes = [2, 32], strides = [1, 1]} : vector<2x128xf32> to vector<2x32xf32>
    %253 = vector.extract_strided_slice %250 {offsets = [0, 64], sizes = [2, 32], strides = [1, 1]} : vector<2x128xf32> to vector<2x32xf32>
    %254 = vector.extract_strided_slice %249 {offsets = [0, 96], sizes = [2, 32], strides = [1, 1]} : vector<2x128xf32> to vector<2x32xf32>
    %255 = arith.mulf %252, %217 : vector<2x32xf32>
    %256 = arith.mulf %251, %253 : vector<2x32xf32>
    %257 = arith.addf %255, %256 : vector<2x32xf32>
    %258 = math.tanh %257 : vector<2x32xf32>
    %259 = arith.mulf %254, %258 : vector<2x32xf32>
    %260 = arith.truncf %259 : vector<2x32xf32> to vector<2x32xbf16>
    %cst_43 = arith.constant dense<0.000000e+00> : vector<2x128xf32>
    %261 = tpu.matmul %260, %9, %cst_43 {dimension_numbers = #tpu.dot_dimension_numbers<[1], [0], [0], [1], [0, 0, 1, 1], [], []>} : vector<2x32xbf16>, vector<32x128xbf16>, vector<2x128xf32> -> vector<2x128xf32>
    %262 = arith.addf %261, %12 : vector<2x128xf32>
    %263 = arith.truncf %240 : vector<2x32xf32> to vector<2x32xbf16>
    %cst_44 = arith.constant dense<0.000000e+00> : vector<2x128xf32>
    %264 = tpu.matmul %263, %8, %cst_44 {dimension_numbers = #tpu.dot_dimension_numbers<[1], [0], [0], [1], [0, 0, 1, 1], [], []>} : vector<2x32xbf16>, vector<32x128xbf16>, vector<2x128xf32> -> vector<2x128xf32>
    %265 = arith.addf %262, %264 : vector<2x128xf32>
    %266 = arith.negf %265 : vector<2x128xf32>
    %267 = math.exp %266 : vector<2x128xf32>
    %cst_45 = arith.constant 1.000000e+00 : f32
    %268 = vector.broadcast %cst_45 : f32 to vector<2x128xf32>
    %269 = arith.addf %268, %267 : vector<2x128xf32>
    %270 = arith.divf %268, %269 : vector<2x128xf32>
    %271 = math.tanh %265 : vector<2x128xf32>
    %272 = vector.extract_strided_slice %270 {offsets = [0, 0], sizes = [2, 32], strides = [1, 1]} : vector<2x128xf32> to vector<2x32xf32>
    %273 = vector.extract_strided_slice %270 {offsets = [0, 32], sizes = [2, 32], strides = [1, 1]} : vector<2x128xf32> to vector<2x32xf32>
    %274 = vector.extract_strided_slice %271 {offsets = [0, 64], sizes = [2, 32], strides = [1, 1]} : vector<2x128xf32> to vector<2x32xf32>
    %275 = vector.extract_strided_slice %270 {offsets = [0, 96], sizes = [2, 32], strides = [1, 1]} : vector<2x128xf32> to vector<2x32xf32>
    %276 = arith.mulf %273, %238 : vector<2x32xf32>
    %277 = arith.mulf %272, %274 : vector<2x32xf32>
    %278 = arith.addf %276, %277 : vector<2x32xf32>
    %279 = math.tanh %278 : vector<2x32xf32>
    %280 = arith.mulf %275, %279 : vector<2x32xf32>
    %281 = vector.extract_strided_slice %6 {offsets = [14, 0], sizes = [2, 128], strides = [1, 1]} : vector<16x128xf32> to vector<2x128xf32>
    %282 = arith.truncf %259 : vector<2x32xf32> to vector<2x32xbf16>
    %cst_46 = arith.constant dense<0.000000e+00> : vector<2x128xf32>
    %283 = tpu.matmul %282, %7, %cst_46 {dimension_numbers = #tpu.dot_dimension_numbers<[1], [0], [0], [1], [0, 0, 1, 1], [], []>} : vector<2x32xbf16>, vector<32x128xbf16>, vector<2x128xf32> -> vector<2x128xf32>
    %284 = arith.addf %281, %283 : vector<2x128xf32>
    %285 = arith.negf %284 : vector<2x128xf32>
    %286 = math.exp %285 : vector<2x128xf32>
    %cst_47 = arith.constant 1.000000e+00 : f32
    %287 = vector.broadcast %cst_47 : f32 to vector<2x128xf32>
    %288 = arith.addf %287, %286 : vector<2x128xf32>
    %289 = arith.divf %287, %288 : vector<2x128xf32>
    %290 = math.tanh %284 : vector<2x128xf32>
    %291 = vector.extract_strided_slice %289 {offsets = [0, 0], sizes = [2, 32], strides = [1, 1]} : vector<2x128xf32> to vector<2x32xf32>
    %292 = vector.extract_strided_slice %289 {offsets = [0, 32], sizes = [2, 32], strides = [1, 1]} : vector<2x128xf32> to vector<2x32xf32>
    %293 = vector.extract_strided_slice %290 {offsets = [0, 64], sizes = [2, 32], strides = [1, 1]} : vector<2x128xf32> to vector<2x32xf32>
    %294 = vector.extract_strided_slice %289 {offsets = [0, 96], sizes = [2, 32], strides = [1, 1]} : vector<2x128xf32> to vector<2x32xf32>
    %295 = arith.mulf %292, %257 : vector<2x32xf32>
    %296 = arith.mulf %291, %293 : vector<2x32xf32>
    %297 = arith.addf %295, %296 : vector<2x32xf32>
    %298 = math.tanh %297 : vector<2x32xf32>
    %299 = arith.mulf %294, %298 : vector<2x32xf32>
    %300 = arith.truncf %299 : vector<2x32xf32> to vector<2x32xbf16>
    %cst_48 = arith.constant dense<0.000000e+00> : vector<2x128xf32>
    %301 = tpu.matmul %300, %9, %cst_48 {dimension_numbers = #tpu.dot_dimension_numbers<[1], [0], [0], [1], [0, 0, 1, 1], [], []>} : vector<2x32xbf16>, vector<32x128xbf16>, vector<2x128xf32> -> vector<2x128xf32>
    %302 = arith.addf %301, %12 : vector<2x128xf32>
    %303 = arith.truncf %280 : vector<2x32xf32> to vector<2x32xbf16>
    %cst_49 = arith.constant dense<0.000000e+00> : vector<2x128xf32>
    %304 = tpu.matmul %303, %8, %cst_49 {dimension_numbers = #tpu.dot_dimension_numbers<[1], [0], [0], [1], [0, 0, 1, 1], [], []>} : vector<2x32xbf16>, vector<32x128xbf16>, vector<2x128xf32> -> vector<2x128xf32>
    %305 = arith.addf %302, %304 : vector<2x128xf32>
    %306 = arith.negf %305 : vector<2x128xf32>
    %307 = math.exp %306 : vector<2x128xf32>
    %cst_50 = arith.constant 1.000000e+00 : f32
    %308 = vector.broadcast %cst_50 : f32 to vector<2x128xf32>
    %309 = arith.addf %308, %307 : vector<2x128xf32>
    %310 = arith.divf %308, %309 : vector<2x128xf32>
    %311 = math.tanh %305 : vector<2x128xf32>
    %312 = vector.extract_strided_slice %310 {offsets = [0, 0], sizes = [2, 32], strides = [1, 1]} : vector<2x128xf32> to vector<2x32xf32>
    %313 = vector.extract_strided_slice %310 {offsets = [0, 32], sizes = [2, 32], strides = [1, 1]} : vector<2x128xf32> to vector<2x32xf32>
    %314 = vector.extract_strided_slice %311 {offsets = [0, 64], sizes = [2, 32], strides = [1, 1]} : vector<2x128xf32> to vector<2x32xf32>
    %315 = vector.extract_strided_slice %310 {offsets = [0, 96], sizes = [2, 32], strides = [1, 1]} : vector<2x128xf32> to vector<2x32xf32>
    %316 = arith.mulf %313, %278 : vector<2x32xf32>
    %317 = arith.mulf %312, %314 : vector<2x32xf32>
    %318 = arith.addf %316, %317 : vector<2x32xf32>
    %319 = math.tanh %318 : vector<2x32xf32>
    %320 = arith.mulf %315, %319 : vector<2x32xf32>
    %321 = arith.truncf %320 : vector<2x32xf32> to vector<2x32xbf16>
    %c0_51 = arith.constant 0 : index
    %c0_52 = arith.constant 0 : index
    %322 = vector.load %arg7[%c0_51, %c0_52] : memref<32x128xbf16, #tpu.memory_space<vmem>>, vector<32x128xbf16>
    %cst_53 = arith.constant dense<0.000000e+00> : vector<2x128xf32>
    %323 = tpu.matmul %321, %322, %cst_53 {dimension_numbers = #tpu.dot_dimension_numbers<[1], [0], [0], [1], [0, 0, 1, 1], [], []>} : vector<2x32xbf16>, vector<32x128xbf16>, vector<2x128xf32> -> vector<2x128xf32>
    %c0_54 = arith.constant 0 : index
    %c0_55 = arith.constant 0 : index
    %324 = vector.load %arg8[%c0_54, %c0_55] : memref<1x128xf32, #tpu.memory_space<vmem>>, vector<1x128xf32>
    %325 = vector.broadcast %324 : vector<1x128xf32> to vector<2x128xf32>
    %326 = arith.addf %323, %325 : vector<2x128xf32>
    %c0_56 = arith.constant 0 : index
    %c0_57 = arith.constant 0 : index
    %327 = vector.load %arg9[%c0_56, %c0_57] : memref<2x128xf32, #tpu.memory_space<vmem>>, vector<2x128xf32>
    tpu.vector_store %arg9[%c0_56, %c0_57], %326 {strides = array<i32>} : memref<2x128xf32, #tpu.memory_space<vmem>>, vector<2x128xf32>,
    return
  }
}

</mosaic_0001>

<llo_original>
// kernel: tpu_custom_call.1
$region0: #{tpu_custom_call.1}
  #allocation0 [shape = 'u32[]', space=smem, size = 0x4, offset = 0x4, fixed_abs, tag = 'smem constant byte address 0x4 - core index']
  #allocation1 [shape = 'u32[144,128]{1,0:T(1,128)}', space=vmem, size = 0x12000, scoped, tag = 'internal scratch']
  %s0 = inlined_call_operand.vmem [shape: bf16[16,4], index: 0, kind: input, shape index: {}]
  %s1 = inlined_call_operand.hbm [shape: bf16[4,128], index: 1, kind: input, shape index: {}]
  %s2 = inlined_call_operand.vmem [shape: bf16[32,128], index: 2, kind: input, shape index: {}]
  %s3 = inlined_call_operand.hbm [shape: f32[1,128], index: 3, kind: input, shape index: {}]
  %s4 = inlined_call_operand.hbm [shape: bf16[32,128], index: 4, kind: input, shape index: {}]
  %s5 = inlined_call_operand.hbm [shape: bf16[32,128], index: 5, kind: input, shape index: {}]
  %s6 = inlined_call_operand.hbm [shape: f32[1,128], index: 6, kind: input, shape index: {}]
  %s7 = inlined_call_operand.vmem [shape: bf16[32,128], index: 7, kind: input, shape index: {}]
  %s8 = inlined_call_operand.vmem [shape: f32[1,128], index: 8, kind: input, shape index: {}]
  %s9 = inlined_call_operand.hbm [shape: f32[2,128], index: 9, kind: output, shape index: {}]
  %s10 = sld [smem:[#allocation0]]
  $region66: #{tpu_custom_call.1} parent=0
    _
  %s12 = ssub.s32 1, %s10
  %s13 = scalar_select 0, %s12, %s10
  $region1: #{tpu_custom_call.1} parent=0
    #allocation2 [shape = 'u8[1024]{0}', space=vmem, size = 0x400, scoped, tag = 'input window, operand 1, single buffered']
    #allocation3 [shape = 's32[1]{0}', space=sflag, size = 0x4, scoped, tag = 'scoped memory for tpu_custom_call.1']
    #allocation4 [shape = 's32[1]{0}', space=sflag, size = 0x4, scoped, tag = 'scoped memory for tpu_custom_call.1']
    #allocation5 [shape = 'u8[512]{0}', space=vmem, size = 0x400, scoped, tag = 'input window, operand 3, single buffered']
    #allocation6 [shape = 's32[1]{0}', space=sflag, size = 0x4, scoped, tag = 'scoped memory for tpu_custom_call.1']
    #allocation7 [shape = 'u8[8192]{0}', space=vmem, size = 0x2000, scoped, tag = 'input window, operand 4, single buffered']
    #allocation8 [shape = 'u8[8192]{0}', space=vmem, size = 0x2000, scoped, tag = 'input window, operand 5, single buffered']
    #allocation9 [shape = 's32[1]{0}', space=sflag, size = 0x4, scoped, tag = 'scoped memory for tpu_custom_call.1']
    #allocation10 [shape = 'u8[512]{0}', space=vmem, size = 0x400, scoped, tag = 'input window, operand 6, single buffered']
    #allocation11 [shape = 'u8[1024]{0}', space=vmem, size = 0x400, scoped, tag = 'output window, operand 0, single buffered']
    %14 = vsyncpa [#allocation3], 0
    %15 = vsyncpa [#allocation6], 0
    %16 = vsyncpa [#allocation9], 0
    %17 = vsyncpa [#allocation4], 0
    // Predicated region
    $region2: #{tpu_custom_call.1} parent=1 // pred_check
      _
    $region3: #{tpu_custom_call.1} parent=1 // pred_check_branch
      %19 = sbr.rel (0) target = $region5
    $region4: #{tpu_custom_call.1} parent=1 // pred_region
      _
    $region5: #{tpu_custom_call.1} parent=1 // pred_fallthru
      _
    // Predicated region
    $region6: #{tpu_custom_call.1} parent=1 // pred_check
      _
    $region7: #{tpu_custom_call.1} parent=1 // pred_check_branch
      %21 = sbr.rel (0) target = $region9
    $region8: #{tpu_custom_call.1} parent=1 // pred_region
      %s23 = ssub.s32 32, 32
      %24 = vsyncadd [#allocation3], %s23
      %s26 = sshll.u32 [#allocation2], 4
      %s27 = int_to_ptr.vmem [resolvable:$true] %s26
      %29 = dma.hbm_to_vmem [thread:$0]  %s1, 32, %s27, [#allocation3]
    $region9: #{tpu_custom_call.1} parent=1 // pred_fallthru
      _
    // Predicated region
    $region10: #{tpu_custom_call.1} parent=1 // pred_check
      _
    $region11: #{tpu_custom_call.1} parent=1 // pred_check_branch
      %31 = sbr.rel (0) target = $region13
    $region12: #{tpu_custom_call.1} parent=1 // pred_region
      _
    $region13: #{tpu_custom_call.1} parent=1 // pred_fallthru
      _
    // Predicated region
    $region14: #{tpu_custom_call.1} parent=1 // pred_check
      _
    $region15: #{tpu_custom_call.1} parent=1 // pred_check_branch
      %33 = sbr.rel (0) target = $region17
    $region16: #{tpu_custom_call.1} parent=1 // pred_region
      %s35 = ssub.s32 16, 16
      %36 = vsyncadd [#allocation6], %s35
      %s38 = sshll.u32 [#allocation5], 4
      %s39 = int_to_ptr.vmem [resolvable:$true] %s38
      %41 = dma.hbm_to_vmem [thread:$0]  %s3, 16, %s39, [#allocation6]
    $region17: #{tpu_custom_call.1} parent=1 // pred_fallthru
      _
    // Predicated region
    $region18: #{tpu_custom_call.1} parent=1 // pred_check
      _
    $region19: #{tpu_custom_call.1} parent=1 // pred_check_branch
      %43 = sbr.rel (0) target = $region21
    $region20: #{tpu_custom_call.1} parent=1 // pred_region
      %s45 = ssub.s32 256, 256
      %46 = vsyncadd [#allocation6], %s45
      %s47 = sshll.u32 [#allocation7], 4
      %s48 = int_to_ptr.vmem [resolvable:$true] %s47
      %53 = dma.hbm_to_vmem [thread:$0]  %s4, 256, %s48, [#allocation6], 64, 64, 4
    $region21: #{tpu_custom_call.1} parent=1 // pred_fallthru
      _
    // Predicated region
    $region22: #{tpu_custom_call.1} parent=1 // pred_check
      _
    $region23: #{tpu_custom_call.1} parent=1 // pred_check_branch
      %55 = sbr.rel (0) target = $region25
    $region24: #{tpu_custom_call.1} parent=1 // pred_region
      %s57 = ssub.s32 256, 256
      %58 = vsyncadd [#allocation9], %s57
      %s59 = sshll.u32 [#allocation8], 4
      %s60 = int_to_ptr.vmem [resolvable:$true] %s59
      %65 = dma.hbm_to_vmem [thread:$0]  %s5, 256, %s60, [#allocation9], 64, 64, 4
    $region25: #{tpu_custom_call.1} parent=1 // pred_fallthru
      _
    // Predicated region
    $region26: #{tpu_custom_call.1} parent=1 // pred_check
      _
    $region27: #{tpu_custom_call.1} parent=1 // pred_check_branch
      %67 = sbr.rel (0) target = $region29
    $region28: #{tpu_custom_call.1} parent=1 // pred_region
      %s69 = ssub.s32 16, 16
      %70 = vsyncadd [#allocation9], %s69
      %s72 = sshll.u32 [#allocation10], 4
      %s73 = int_to_ptr.vmem [resolvable:$true] %s72
      %75 = dma.hbm_to_vmem [thread:$0]  %s6, 16, %s73, [#allocation9]
    $region29: #{tpu_custom_call.1} parent=1 // pred_fallthru
      _
    // Predicated region
    $region30: #{tpu_custom_call.1} parent=1 // pred_check
      _
    $region31: #{tpu_custom_call.1} parent=1 // pred_check_branch
      %77 = sbr.rel (0) target = $region33
    $region32: #{tpu_custom_call.1} parent=1 // pred_region
      _
    $region33: #{tpu_custom_call.1} parent=1 // pred_fallthru
      _
    // Predicated region
    $region34: #{tpu_custom_call.1} parent=1 // pred_check
      _
    $region35: #{tpu_custom_call.1} parent=1 // pred_check_branch
      %79 = sbr.rel (0) target = $region37
    $region36: #{tpu_custom_call.1} parent=1 // pred_region
      _
    $region37: #{tpu_custom_call.1} parent=1 // pred_fallthru
      _
    // Predicated region
    $region38: #{tpu_custom_call.1} parent=1 // pred_check
      _
    $region39: #{tpu_custom_call.1} parent=1 // pred_check_branch
      %81 = sbr.rel (0) target = $region41
    $region40: #{tpu_custom_call.1} parent=1 // pred_region
      %82 = dma.done [#allocation3], 32
    $region41: #{tpu_custom_call.1} parent=1 // pred_fallthru
      _
    // Predicated region
    $region42: #{tpu_custom_call.1} parent=1 // pred_check
      _
    $region43: #{tpu_custom_call.1} parent=1 // pred_check_branch
      %84 = sbr.rel (0) target = $region45
    $region44: #{tpu_custom_call.1} parent=1 // pred_region
      %85 = dma.done [#allocation6], 16
    $region45: #{tpu_custom_call.1} parent=1 // pred_fallthru
      _
    // Predicated region
    $region46: #{tpu_custom_call.1} parent=1 // pred_check
      _
    $region47: #{tpu_custom_call.1} parent=1 // pred_check_branch
      %87 = sbr.rel (0) target = $region49
    $region48: #{tpu_custom_call.1} parent=1 // pred_region
      %88 = dma.done [#allocation6], 256
    $region49: #{tpu_custom_call.1} parent=1 // pred_fallthru
      _
    // Predicated region
    $region50: #{tpu_custom_call.1} parent=1 // pred_check
      _
    $region51: #{tpu_custom_call.1} parent=1 // pred_check_branch
      %90 = sbr.rel (0) target = $region53
    $region52: #{tpu_custom_call.1} parent=1 // pred_region
      %91 = dma.done [#allocation9], 256
    $region53: #{tpu_custom_call.1} parent=1 // pred_fallthru
      _
    // Predicated region
    $region54: #{tpu_custom_call.1} parent=1 // pred_check
      _
    $region55: #{tpu_custom_call.1} parent=1 // pred_check_branch
      %93 = sbr.rel (0) target = $region57
    $region56: #{tpu_custom_call.1} parent=1 // pred_region
      %94 = dma.done [#allocation9], 16
    $region57: #{tpu_custom_call.1} parent=1 // pred_fallthru
      _
    %v96 = vld [vmem:[#allocation5] sm:$0x1]
    %v98 = vlaneseq
    %v99 = vshrl.u32 %v98, 7
    %v100 = vsub.s32 0, %v99
    %v101 = vrot.slane %v96, %v100
    %v103 = vld [vmem:[%s0] sm:$0xf]
    %v104 = vld [vmem:[%s0 + $0x4] sm:$0xf]
    %v105 = vld [vmem:[#allocation2] sm:$0x3]
    %v108 = vunpack.c.l.b16 %v103
    %v109 = vunpack.c.l.b16 %v104
    %v110 = vpack.c.b16 %v109, %v108
    %vm111 = vcmask 31744
    %v113 = vsel %vm111, %v110, 0
    %vm115 = vcmask 1041408
    %v117 = vsel %vm115, %v105, 0
    %119 = vmatprep.subr.bf16.mxu0 0
    %120 = vmatpush1.bf16.msra.mxu0 %v117
    %121 = vmatprep.subr.bf16.mxu0 0
    %122 = vmatpush1.bf16.msra.mxu0 0
    %123 = vmatprep.subr.bf16.mxu0 0
    %124 = vmatpush1.bf16.msra.mxu0 0
    %125 = vmatprep.subr.bf16.mxu0 0
    %126 = vmatpush1.bf16.msra.mxu0 0
    %127 = vmatprep.subr.bf16.mxu0 0
    %128 = vmatpush1.bf16.msra.mxu0 0
    %129 = vmatprep.subr.bf16.mxu0 0
    %130 = vmatpush1.bf16.msra.mxu0 0
    %131 = vmatprep.subr.bf16.mxu0 0
    %132 = vmatpush1.bf16.msra.mxu0 0
    %133 = vmatprep.subr.bf16.mxu0 0
    %134 = vmatpush1.bf16.msra.mxu0 0
    %135 = vmatprep.subr.bf16.mxu0 0
    %136 = vmatpush1.bf16.msra.mxu0 0
    %137 = vmatprep.subr.bf16.mxu0 0
    %138 = vmatpush1.bf16.msra.mxu0 0
    %139 = vmatprep.subr.bf16.mxu0 0
    %140 = vmatpush1.bf16.msra.mxu0 0
    %141 = vmatprep.subr.bf16.mxu0 0
    %142 = vmatpush1.bf16.msra.mxu0 0
    %143 = vmatprep.subr.bf16.mxu0 0
    %144 = vmatpush1.bf16.msra.mxu0 0
    %145 = vmatprep.subr.bf16.mxu0 0
    %146 = vmatpush1.bf16.msra.mxu0 0
    %147 = vmatprep.subr.bf16.mxu0 0
    %148 = vmatpush1.bf16.msra.mxu0 0
    %149 = vmatprep.subr.bf16.mxu0 0
    %150 = vmatpush1.bf16.msra.mxu0 0
    %151 = vmatprep.mubr.bf16.mxu0 0
    %152 = vmatmul.mubr.bf16.gmra.mrb[0].mxu0 %v113
    %v153 = vpop.f32.mrb[0].mxu0
    %v154 = vadd.f32 %v101, %v153
    %v155 = vpop.f32.mrb[0].mxu0
    %v156 = vpop.f32.mrb[0].mxu0
    %v157 = vadd.f32 %v101, %v156
    %v158 = vpop.f32.mrb[0].mxu0
    %159 = vdwg.mxu0
    %v160 = vld [vmem:[%s2] sm:$0xf]
    %v161 = vld [vmem:[%s2 + $0x4] sm:$0xf]
    %v162 = vld [vmem:[%s2 + $0x8] sm:$0xf]
    %v163 = vld [vmem:[%s2 + $0xc] sm:$0xf]
    %v164 = vld [vmem:[#allocation8] sm:$0xf]
    %v165 = vld [vmem:[#allocation8 + $0x4] sm:$0xf]
    %v166 = vld [vmem:[#allocation8 + $0x8] sm:$0xf]
    %v167 = vld [vmem:[#allocation8 + $0xc] sm:$0xf]
    %v168 = vld [vmem:[#allocation7] sm:$0xf]
    %v169 = vld [vmem:[#allocation7 + $0x4] sm:$0xf]
    %v170 = vld [vmem:[#allocation7 + $0x8] sm:$0xf]
    %v171 = vld [vmem:[#allocation7 + $0xc] sm:$0xf]
    %v172 = vld [vmem:[#allocation10] sm:$0x1]
    %v174 = vlaneseq
    %v175 = vshrl.u32 %v174, 7
    %v176 = vsub.s32 0, %v175
    %v177 = vrot.slane %v172, %v176
    %v179 = vxor.u32 %v154, 2147483648
    %v180 = vmul.f32 %v179, 1.442695
    %v181 = vpow.pop %v180
    %v182 = vadd.f32 %v181, 1.0
    %v183 = vrcp.pop %v182
    %v184 = vmul.f32 1.0, %v183
    %v185 = vtanh.pop %v154
    %187 = vrot.lane.b32.xlu0 %v185, 64
    %v188 = vpop.permute.xlu0 %187
    %v190 = vmul.f32 %v184, %v188
    %v191 = vtanh.pop %v190
    %193 = vrot.lane.b32.xlu0 %v191, 96
    %v194 = vpop.permute.xlu0 %193
    %v196 = vmul.f32 %v184, %v194
    %v197 = vpack.c.bf16 %v196, %v196
    %199 = vrot.lane.b32.xlu0 %v197, 32
    %v200 = vpop.permute.xlu0 %199
    %v205 = vunpack.c.l.b16 %v168
    %v206 = vunpack.c.l.b16 %v169
    %v207 = vunpack.c.l.b16 %v170
    %v208 = vunpack.c.l.b16 %v171
    %v209 = vpack.c.b16 %v206, %v205
    %v210 = vpack.c.b16 %v208, %v207
    %vm213 = vcmask 261120
    %v215 = vsel %vm213, %v200, 0
    %217 = vmatprep.subr.bf16.mxu0 0
    %218 = vmatpush1.bf16.msra.mxu0 %v209
    %219 = vmatprep.subr.bf16.mxu0 0
    %220 = vmatpush1.bf16.msra.mxu0 %v210
    %221 = vmatprep.subr.bf16.mxu0 0
    %222 = vmatpush1.bf16.msra.mxu0 0
    %223 = vmatprep.subr.bf16.mxu0 0
    %224 = vmatpush1.bf16.msra.mxu0 0
    %225 = vmatprep.subr.bf16.mxu0 0
    %226 = vmatpush1.bf16.msra.mxu0 0
    %227 = vmatprep.subr.bf16.mxu0 0
    %228 = vmatpush1.bf16.msra.mxu0 0
    %229 = vmatprep.subr.bf16.mxu0 0
    %230 = vmatpush1.bf16.msra.mxu0 0
    %231 = vmatprep.subr.bf16.mxu0 0
    %232 = vmatpush1.bf16.msra.mxu0 0
    %233 = vmatprep.subr.bf16.mxu0 0
    %234 = vmatpush1.bf16.msra.mxu0 0
    %235 = vmatprep.subr.bf16.mxu0 0
    %236 = vmatpush1.bf16.msra.mxu0 0
    %237 = vmatprep.subr.bf16.mxu0 0
    %238 = vmatpush1.bf16.msra.mxu0 0
    %239 = vmatprep.subr.bf16.mxu0 0
    %240 = vmatpush1.bf16.msra.mxu0 0
    %241 = vmatprep.subr.bf16.mxu0 0
    %242 = vmatpush1.bf16.msra.mxu0 0
    %243 = vmatprep.subr.bf16.mxu0 0
    %244 = vmatpush1.bf16.msra.mxu0 0
    %245 = vmatprep.subr.bf16.mxu0 0
    %246 = vmatpush1.bf16.msra.mxu0 0
    %247 = vmatprep.subr.bf16.mxu0 0
    %248 = vmatpush1.bf16.msra.mxu0 0
    %249 = vmatprep.mubr.bf16.mxu0 0
    %250 = vmatmul.mubr.bf16.gmra.mrb[0].mxu0 %v215
    %v251 = vpop.f32.mrb[0].mxu0
    %v252 = vadd.f32 %v177, %v251
    %v253 = vpop.f32.mrb[0].mxu0
    %v254 = vpop.f32.mrb[0].mxu0
    %v255 = vpop.f32.mrb[0].mxu0
    %256 = vdwg.mxu0
    %v257 = vxor.u32 %v252, 2147483648
    %v258 = vmul.f32 %v257, 1.442695
    %v259 = vpow.pop %v258
    %v260 = vadd.f32 %v259, 1.0
    %v261 = vrcp.pop %v260
    %v262 = vmul.f32 1.0, %v261
    %v263 = vtanh.pop %v252
    %265 = vrot.lane.b32.xlu0 %v263, 64
    %v266 = vpop.permute.xlu0 %265
    %v268 = vmul.f32 %v262, %v266
    %v269 = vtanh.pop %v268
    %271 = vrot.lane.b32.xlu0 %v269, 96
    %v272 = vpop.permute.xlu0 %271
    %v274 = vmul.f32 %v262, %v272
    %v279 = vunpack.c.l.b16 %v160
    %v280 = vunpack.c.l.b16 %v161
    %v281 = vunpack.c.l.b16 %v162
    %v282 = vunpack.c.l.b16 %v163
    %v283 = vpack.c.b16 %v280, %v279
    %v284 = vpack.c.b16 %v282, %v281
    %287 = vmatprep.subr.bf16.mxu0 0
    %288 = vmatpush1.bf16.msra.mxu0 %v283
    %289 = vmatprep.subr.bf16.mxu0 0
    %290 = vmatpush1.bf16.msra.mxu0 %v284
    %291 = vmatprep.subr.bf16.mxu0 0
    %292 = vmatpush1.bf16.msra.mxu0 0
    %293 = vmatprep.subr.bf16.mxu0 0
    %294 = vmatpush1.bf16.msra.mxu0 0
    %295 = vmatprep.subr.bf16.mxu0 0
    %296 = vmatpush1.bf16.msra.mxu0 0
    %297 = vmatprep.subr.bf16.mxu0 0
    %298 = vmatpush1.bf16.msra.mxu0 0
    %299 = vmatprep.subr.bf16.mxu0 0
    %300 = vmatpush1.bf16.msra.mxu0 0
    %301 = vmatprep.subr.bf16.mxu0 0
    %302 = vmatpush1.bf16.msra.mxu0 0
    %303 = vmatprep.subr.bf16.mxu0 0
    %304 = vmatpush1.bf16.msra.mxu0 0
    %305 = vmatprep.subr.bf16.mxu0 0
    %306 = vmatpush1.bf16.msra.mxu0 0
    %307 = vmatprep.subr.bf16.mxu0 0
    %308 = vmatpush1.bf16.msra.mxu0 0
    %309 = vmatprep.subr.bf16.mxu0 0
    %310 = vmatpush1.bf16.msra.mxu0 0
    %311 = vmatprep.subr.bf16.mxu0 0
    %312 = vmatpush1.bf16.msra.mxu0 0
    %313 = vmatprep.subr.bf16.mxu0 0
    %314 = vmatpush1.bf16.msra.mxu0 0
    %315 = vmatprep.subr.bf16.mxu0 0
    %316 = vmatpush1.bf16.msra.mxu0 0
    %317 = vmatprep.subr.bf16.mxu0 0
    %318 = vmatpush1.bf16.msra.mxu0 0
    %319 = vmatprep.mubr.bf16.mxu0 0
    %320 = vmatmul.mubr.bf16.gmra.mrb[0].mxu0 %v215
    %v321 = vpop.f32.mrb[0].mxu0
    %v322 = vadd.f32 0.0, %v321
    %v323 = vpop.f32.mrb[0].mxu0
    %v324 = vpop.f32.mrb[0].mxu0
    %v325 = vpop.f32.mrb[0].mxu0
    %326 = vdwg.mxu0
    %v328 = vrot.slane %v322, 6
    %v330 = vadd.f32 %v154, %v328
    %v331 = vxor.u32 %v330, 2147483648
    %v332 = vmul.f32 %v331, 1.442695
    %v333 = vpow.pop %v332
    %v334 = vadd.f32 %v333, 1.0
    %v335 = vrcp.pop %v334
    %v336 = vmul.f32 1.0, %v335
    %v337 = vtanh.pop %v330
    %v339 = vrot.slane %v190, 6
    %340 = vrot.lane.b32.xlu0 %v339, 32
    %v341 = vpop.permute.xlu0 %340
    %v343 = vmul.f32 %v336, %v341
    %345 = vrot.lane.b32.xlu0 %v337, 64
    %v346 = vpop.permute.xlu0 %345
    %v348 = vmul.f32 %v336, %v346
    %350 = vrot.lane.b32.xlu0 %v348, 32
    %v351 = vpop.permute.xlu0 %350
    %v353 = vadd.f32 %v343, %v351
    %v354 = vtanh.pop %v353
    %356 = vrot.lane.b32.xlu0 %v354, 64
    %v357 = vpop.permute.xlu0 %356
    %v359 = vmul.f32 %v336, %v357
    %v360 = vpack.c.bf16 %v359, %v359
    %v362 = vrot.slane %v360, 1
    %363 = vrot.lane.b32.xlu0 %v362, 32
    %v364 = vpop.permute.xlu0 %363
    %v366 = vsel %vm213, %v364, 0
    %368 = vmatprep.subr.bf16.mxu0 0
    %369 = vmatpush1.bf16.msra.mxu0 %v209
    %370 = vmatprep.subr.bf16.mxu0 0
    %371 = vmatpush1.bf16.msra.mxu0 %v210
    %372 = vmatprep.subr.bf16.mxu0 0
    %373 = vmatpush1.bf16.msra.mxu0 0
    %374 = vmatprep.subr.bf16.mxu0 0
    %375 = vmatpush1.bf16.msra.mxu0 0
    %376 = vmatprep.subr.bf16.mxu0 0
    %377 = vmatpush1.bf16.msra.mxu0 0
    %378 = vmatprep.subr.bf16.mxu0 0
    %379 = vmatpush1.bf16.msra.mxu0 0
    %380 = vmatprep.subr.bf16.mxu0 0
    %381 = vmatpush1.bf16.msra.mxu0 0
    %382 = vmatprep.subr.bf16.mxu0 0
    %383 = vmatpush1.bf16.msra.mxu0 0
    %384 = vmatprep.subr.bf16.mxu0 0
    %385 = vmatpush1.bf16.msra.mxu0 0
    %386 = vmatprep.subr.bf16.mxu0 0
    %387 = vmatpush1.bf16.msra.mxu0 0
    %388 = vmatprep.subr.bf16.mxu0 0
    %389 = vmatpush1.bf16.msra.mxu0 0
    %390 = vmatprep.subr.bf16.mxu0 0
    %391 = vmatpush1.bf16.msra.mxu0 0
    %392 = vmatprep.subr.bf16.mxu0 0
    %393 = vmatpush1.bf16.msra.mxu0 0
    %394 = vmatprep.subr.bf16.mxu0 0
    %395 = vmatpush1.bf16.msra.mxu0 0
    %396 = vmatprep.subr.bf16.mxu0 0
    %397 = vmatpush1.bf16.msra.mxu0 0
    %398 = vmatprep.subr.bf16.mxu0 0
    %399 = vmatpush1.bf16.msra.mxu0 0
    %400 = vmatprep.mubr.bf16.mxu0 0
    %401 = vmatmul.mubr.bf16.gmra.mrb[0].mxu0 %v366
    %v402 = vpop.f32.mrb[0].mxu0
    %v403 = vadd.f32 %v177, %v402
    %v404 = vpop.f32.mrb[0].mxu0
    %v405 = vpop.f32.mrb[0].mxu0
    %v406 = vpop.f32.mrb[0].mxu0
    %407 = vdwg.mxu0
    %v408 = vpack.c.bf16 %v274, %v274
    %410 = vrot.lane.b32.xlu0 %v408, 32
    %v411 = vpop.permute.xlu0 %410
    %v416 = vunpack.c.l.b16 %v164
    %v417 = vunpack.c.l.b16 %v165
    %v418 = vunpack.c.l.b16 %v166
    %v419 = vunpack.c.l.b16 %v167
    %v420 = vpack.c.b16 %v417, %v416
    %v421 = vpack.c.b16 %v419, %v418
    %v425 = vsel %vm213, %v411, 0
    %427 = vmatprep.subr.bf16.mxu0 0
    %428 = vmatpush1.bf16.msra.mxu0 %v420
    %429 = vmatprep.subr.bf16.mxu0 0
    %430 = vmatpush1.bf16.msra.mxu0 %v421
    %431 = vmatprep.subr.bf16.mxu0 0
    %432 = vmatpush1.bf16.msra.mxu0 0
    %433 = vmatprep.subr.bf16.mxu0 0
    %434 = vmatpush1.bf16.msra.mxu0 0
    %435 = vmatprep.subr.bf16.mxu0 0
    %436 = vmatpush1.bf16.msra.mxu0 0
    %437 = vmatprep.subr.bf16.mxu0 0
    %438 = vmatpush1.bf16.msra.mxu0 0
    %439 = vmatprep.subr.bf16.mxu0 0
    %440 = vmatpush1.bf16.msra.mxu0 0
    %441 = vmatprep.subr.bf16.mxu0 0
    %442 = vmatpush1.bf16.msra.mxu0 0
    %443 = vmatprep.subr.bf16.mxu0 0
    %444 = vmatpush1.bf16.msra.mxu0 0
    %445 = vmatprep.subr.bf16.mxu0 0
    %446 = vmatpush1.bf16.msra.mxu0 0
    %447 = vmatprep.subr.bf16.mxu0 0
    %448 = vmatpush1.bf16.msra.mxu0 0
    %449 = vmatprep.subr.bf16.mxu0 0
    %450 = vmatpush1.bf16.msra.mxu0 0
    %451 = vmatprep.subr.bf16.mxu0 0
    %452 = vmatpush1.bf16.msra.mxu0 0
    %453 = vmatprep.subr.bf16.mxu0 0
    %454 = vmatpush1.bf16.msra.mxu0 0
    %455 = vmatprep.subr.bf16.mxu0 0
    %456 = vmatpush1.bf16.msra.mxu0 0
    %457 = vmatprep.subr.bf16.mxu0 0
    %458 = vmatpush1.bf16.msra.mxu0 0
    %459 = vmatprep.mubr.bf16.mxu0 0
    %460 = vmatmul.mubr.bf16.gmra.mrb[0].mxu0 %v425
    %v461 = vpop.f32.mrb[0].mxu0
    %v462 = vadd.f32 0.0, %v461
    %v463 = vpop.f32.mrb[0].mxu0
    %v464 = vpop.f32.mrb[0].mxu0
    %v465 = vpop.f32.mrb[0].mxu0
    %466 = vdwg.mxu0
    %v467 = vadd.f32 %v403, %v462
    %v468 = vxor.u32 %v467, 2147483648
    %v469 = vmul.f32 %v468, 1.442695
    %v470 = vpow.pop %v469
    %v471 = vadd.f32 %v470, 1.0
    %v472 = vrcp.pop %v471
    %v473 = vmul.f32 1.0, %v472
    %v474 = vtanh.pop %v467
    %476 = vrot.lane.b32.xlu0 %v268, 32
    %v477 = vpop.permute.xlu0 %476
    %v479 = vmul.f32 %v473, %v477
    %481 = vrot.lane.b32.xlu0 %v474, 64
    %v482 = vpop.permute.xlu0 %481
    %v484 = vmul.f32 %v473, %v482
    %486 = vrot.lane.b32.xlu0 %v484, 32
    %v487 = vpop.permute.xlu0 %486
    %v489 = vadd.f32 %v479, %v487
    %v490 = vtanh.pop %v489
    %492 = vrot.lane.b32.xlu0 %v490, 64
    %v493 = vpop.permute.xlu0 %492
    %v495 = vmul.f32 %v473, %v493
    %496 = vmatprep.subr.bf16.mxu0 0
    %497 = vmatpush1.bf16.msra.mxu0 %v283
    %498 = vmatprep.subr.bf16.mxu0 0
    %499 = vmatpush1.bf16.msra.mxu0 %v284
    %500 = vmatprep.subr.bf16.mxu0 0
    %501 = vmatpush1.bf16.msra.mxu0 0
    %502 = vmatprep.subr.bf16.mxu0 0
    %503 = vmatpush1.bf16.msra.mxu0 0
    %504 = vmatprep.subr.bf16.mxu0 0
    %505 = vmatpush1.bf16.msra.mxu0 0
    %506 = vmatprep.subr.bf16.mxu0 0
    %507 = vmatpush1.bf16.msra.mxu0 0
    %508 = vmatprep.subr.bf16.mxu0 0
    %509 = vmatpush1.bf16.msra.mxu0 0
    %510 = vmatprep.subr.bf16.mxu0 0
    %511 = vmatpush1.bf16.msra.mxu0 0
    %512 = vmatprep.subr.bf16.mxu0 0
    %513 = vmatpush1.bf16.msra.mxu0 0
    %514 = vmatprep.subr.bf16.mxu0 0
    %515 = vmatpush1.bf16.msra.mxu0 0
    %516 = vmatprep.subr.bf16.mxu0 0
    %517 = vmatpush1.bf16.msra.mxu0 0
    %518 = vmatprep.subr.bf16.mxu0 0
    %519 = vmatpush1.bf16.msra.mxu0 0
    %520 = vmatprep.subr.bf16.mxu0 0
    %521 = vmatpush1.bf16.msra.mxu0 0
    %522 = vmatprep.subr.bf16.mxu0 0
    %523 = vmatpush1.bf16.msra.mxu0 0
    %524 = vmatprep.subr.bf16.mxu0 0
    %525 = vmatpush1.bf16.msra.mxu0 0
    %526 = vmatprep.subr.bf16.mxu0 0
    %527 = vmatpush1.bf16.msra.mxu0 0
    %528 = vmatprep.mubr.bf16.mxu0 0
    %529 = vmatmul.mubr.bf16.gmra.mrb[0].mxu0 %v366
    %v530 = vpop.f32.mrb[0].mxu0
    %v531 = vadd.f32 0.0, %v530
    %v532 = vpop.f32.mrb[0].mxu0
    %v533 = vpop.f32.mrb[0].mxu0
    %v534 = vpop.f32.mrb[0].mxu0
    %535 = vdwg.mxu0
    %v537 = vrot.slane %v531, 4
    %v539 = vadd.f32 %v154, %v537
    %v540 = vxor.u32 %v539, 2147483648
    %v541 = vmul.f32 %v540, 1.442695
    %v542 = vpow.pop %v541
    %v543 = vadd.f32 %v542, 1.0
    %v544 = vrcp.pop %v543
    %v545 = vmul.f32 1.0, %v544
    %v546 = vtanh.pop %v539
    %v548 = vrot.slane %v353, 6
    %v550 = vmul.f32 %v545, %v548
    %552 = vrot.lane.b32.xlu0 %v546, 64
    %v553 = vpop.permute.xlu0 %552
    %v555 = vmul.f32 %v545, %v553
    %557 = vrot.lane.b32.xlu0 %v555, 32
    %v558 = vpop.permute.xlu0 %557
    %v560 = vadd.f32 %v550, %v558
    %v561 = vtanh.pop %v560
    %563 = vrot.lane.b32.xlu0 %v561, 64
    %v564 = vpop.permute.xlu0 %563
    %v566 = vmul.f32 %v545, %v564
    %v567 = vpack.c.bf16 %v566, %v566
    %v569 = vrot.slane %v567, 2
    %570 = vrot.lane.b32.xlu0 %v569, 32
    %v571 = vpop.permute.xlu0 %570
    %v573 = vsel %vm213, %v571, 0
    %575 = vmatprep.subr.bf16.mxu0 0
    %576 = vmatpush1.bf16.msra.mxu0 %v209
    %577 = vmatprep.subr.bf16.mxu0 0
    %578 = vmatpush1.bf16.msra.mxu0 %v210
    %579 = vmatprep.subr.bf16.mxu0 0
    %580 = vmatpush1.bf16.msra.mxu0 0
    %581 = vmatprep.subr.bf16.mxu0 0
    %582 = vmatpush1.bf16.msra.mxu0 0
    %583 = vmatprep.subr.bf16.mxu0 0
    %584 = vmatpush1.bf16.msra.mxu0 0
    %585 = vmatprep.subr.bf16.mxu0 0
    %586 = vmatpush1.bf16.msra.mxu0 0
    %587 = vmatprep.subr.bf16.mxu0 0
    %588 = vmatpush1.bf16.msra.mxu0 0
    %589 = vmatprep.subr.bf16.mxu0 0
    %590 = vmatpush1.bf16.msra.mxu0 0
    %591 = vmatprep.subr.bf16.mxu0 0
    %592 = vmatpush1.bf16.msra.mxu0 0
    %593 = vmatprep.subr.bf16.mxu0 0
    %594 = vmatpush1.bf16.msra.mxu0 0
    %595 = vmatprep.subr.bf16.mxu0 0
    %596 = vmatpush1.bf16.msra.mxu0 0
    %597 = vmatprep.subr.bf16.mxu0 0
    %598 = vmatpush1.bf16.msra.mxu0 0
    %599 = vmatprep.subr.bf16.mxu0 0
    %600 = vmatpush1.bf16.msra.mxu0 0
    %601 = vmatprep.subr.bf16.mxu0 0
    %602 = vmatpush1.bf16.msra.mxu0 0
    %603 = vmatprep.subr.bf16.mxu0 0
    %604 = vmatpush1.bf16.msra.mxu0 0
    %605 = vmatprep.subr.bf16.mxu0 0
    %606 = vmatpush1.bf16.msra.mxu0 0
    %607 = vmatprep.mubr.bf16.mxu0 0
    %608 = vmatmul.mubr.bf16.gmra.mrb[0].mxu0 %v573
    %v609 = vpop.f32.mrb[0].mxu0
    %v610 = vadd.f32 %v177, %v609
    %v611 = vpop.f32.mrb[0].mxu0
    %v612 = vpop.f32.mrb[0].mxu0
    %v613 = vpop.f32.mrb[0].mxu0
    %614 = vdwg.mxu0
    %v615 = vpack.c.bf16 %v495, %v495
    %617 = vrot.lane.b32.xlu0 %v615, 32
    %v618 = vpop.permute.xlu0 %617
    %v620 = vsel %vm213, %v618, 0
    %622 = vmatprep.subr.bf16.mxu0 0
    %623 = vmatpush1.bf16.msra.mxu0 %v420
    %624 = vmatprep.subr.bf16.mxu0 0
    %625 = vmatpush1.bf16.msra.mxu0 %v421
    %626 = vmatprep.subr.bf16.mxu0 0
    %627 = vmatpush1.bf16.msra.mxu0 0
    %628 = vmatprep.subr.bf16.mxu0 0
    %629 = vmatpush1.bf16.msra.mxu0 0
    %630 = vmatprep.subr.bf16.mxu0 0
    %631 = vmatpush1.bf16.msra.mxu0 0
    %632 = vmatprep.subr.bf16.mxu0 0
    %633 = vmatpush1.bf16.msra.mxu0 0
    %634 = vmatprep.subr.bf16.mxu0 0
    %635 = vmatpush1.bf16.msra.mxu0 0
    %636 = vmatprep.subr.bf16.mxu0 0
    %637 = vmatpush1.bf16.msra.mxu0 0
    %638 = vmatprep.subr.bf16.mxu0 0
    %639 = vmatpush1.bf16.msra.mxu0 0
    %640 = vmatprep.subr.bf16.mxu0 0
    %641 = vmatpush1.bf16.msra.mxu0 0
    %642 = vmatprep.subr.bf16.mxu0 0
    %643 = vmatpush1.bf16.msra.mxu0 0
    %644 = vmatprep.subr.bf16.mxu0 0
    %645 = vmatpush1.bf16.msra.mxu0 0
    %646 = vmatprep.subr.bf16.mxu0 0
    %647 = vmatpush1.bf16.msra.mxu0 0
    %648 = vmatprep.subr.bf16.mxu0 0
    %649 = vmatpush1.bf16.msra.mxu0 0
    %650 = vmatprep.subr.bf16.mxu0 0
    %651 = vmatpush1.bf16.msra.mxu0 0
    %652 = vmatprep.subr.bf16.mxu0 0
    %653 = vmatpush1.bf16.msra.mxu0 0
    %654 = vmatprep.mubr.bf16.mxu0 0
    %655 = vmatmul.mubr.bf16.gmra.mrb[0].mxu0 %v620
    %v656 = vpop.f32.mrb[0].mxu0
    %v657 = vadd.f32 0.0, %v656
    %v658 = vpop.f32.mrb[0].mxu0
    %v659 = vpop.f32.mrb[0].mxu0
    %v660 = vpop.f32.mrb[0].mxu0
    %661 = vdwg.mxu0
    %v662 = vadd.f32 %v610, %v657
    %v663 = vxor.u32 %v662, 2147483648
    %v664 = vmul.f32 %v663, 1.442695
    %v665 = vpow.pop %v664
    %v666 = vadd.f32 %v665, 1.0
    %v667 = vrcp.pop %v666
    %v668 = vmul.f32 1.0, %v667
    %v669 = vtanh.pop %v662
    %v670 = vmul.f32 %v668, %v489
    %672 = vrot.lane.b32.xlu0 %v669, 64
    %v673 = vpop.permute.xlu0 %672
    %v675 = vmul.f32 %v668, %v673
    %677 = vrot.lane.b32.xlu0 %v675, 32
    %v678 = vpop.permute.xlu0 %677
    %v680 = vadd.f32 %v670, %v678
    %v681 = vtanh.pop %v680
    %683 = vrot.lane.b32.xlu0 %v681, 64
    %v684 = vpop.permute.xlu0 %683
    %v686 = vmul.f32 %v668, %v684
    %687 = vmatprep.subr.bf16.mxu0 0
    %688 = vmatpush1.bf16.msra.mxu0 %v283
    %689 = vmatprep.subr.bf16.mxu0 0
    %690 = vmatpush1.bf16.msra.mxu0 %v284
    %691 = vmatprep.subr.bf16.mxu0 0
    %692 = vmatpush1.bf16.msra.mxu0 0
    %693 = vmatprep.subr.bf16.mxu0 0
    %694 = vmatpush1.bf16.msra.mxu0 0
    %695 = vmatprep.subr.bf16.mxu0 0
    %696 = vmatpush1.bf16.msra.mxu0 0
    %697 = vmatprep.subr.bf16.mxu0 0
    %698 = vmatpush1.bf16.msra.mxu0 0
    %699 = vmatprep.subr.bf16.mxu0 0
    %700 = vmatpush1.bf16.msra.mxu0 0
    %701 = vmatprep.subr.bf16.mxu0 0
    %702 = vmatpush1.bf16.msra.mxu0 0
    %703 = vmatprep.subr.bf16.mxu0 0
    %704 = vmatpush1.bf16.msra.mxu0 0
    %705 = vmatprep.subr.bf16.mxu0 0
    %706 = vmatpush1.bf16.msra.mxu0 0
    %707 = vmatprep.subr.bf16.mxu0 0
    %708 = vmatpush1.bf16.msra.mxu0 0
    %709 = vmatprep.subr.bf16.mxu0 0
    %710 = vmatpush1.bf16.msra.mxu0 0
    %711 = vmatprep.subr.bf16.mxu0 0
    %712 = vmatpush1.bf16.msra.mxu0 0
    %713 = vmatprep.subr.bf16.mxu0 0
    %714 = vmatpush1.bf16.msra.mxu0 0
    %715 = vmatprep.subr.bf16.mxu0 0
    %716 = vmatpush1.bf16.msra.mxu0 0
    %717 = vmatprep.subr.bf16.mxu0 0
    %718 = vmatpush1.bf16.msra.mxu0 0
    %719 = vmatprep.mubr.bf16.mxu0 0
    %720 = vmatmul.mubr.bf16.gmra.mrb[0].mxu0 %v573
    %v721 = vpop.f32.mrb[0].mxu0
    %v722 = vadd.f32 0.0, %v721
    %v723 = vpop.f32.mrb[0].mxu0
    %v724 = vpop.f32.mrb[0].mxu0
    %v725 = vpop.f32.mrb[0].mxu0
    %726 = vdwg.mxu0
    %v728 = vrot.slane %v722, 2
    %v730 = vadd.f32 %v154, %v728
    %v731 = vxor.u32 %v730, 2147483648
    %v732 = vmul.f32 %v731, 1.442695
    %v733 = vpow.pop %v732
    %v734 = vadd.f32 %v733, 1.0
    %v735 = vrcp.pop %v734
    %v736 = vmul.f32 1.0, %v735
    %v737 = vtanh.pop %v730
    %v739 = vrot.slane %v560, 6
    %v741 = vmul.f32 %v736, %v739
    %743 = vrot.lane.b32.xlu0 %v737, 64
    %v744 = vpop.permute.xlu0 %743
    %v746 = vmul.f32 %v736, %v744
    %748 = vrot.lane.b32.xlu0 %v746, 32
    %v749 = vpop.permute.xlu0 %748
    %v751 = vadd.f32 %v741, %v749
    %v752 = vtanh.pop %v751
    %754 = vrot.lane.b32.xlu0 %v752, 64
    %v755 = vpop.permute.xlu0 %754
    %v757 = vmul.f32 %v736, %v755
    %v758 = vpack.c.bf16 %v757, %v757
    %v760 = vrot.slane %v758, 3
    %761 = vrot.lane.b32.xlu0 %v760, 32
    %v762 = vpop.permute.xlu0 %761
    %v764 = vsel %vm213, %v762, 0
    %766 = vmatprep.subr.bf16.mxu0 0
    %767 = vmatpush1.bf16.msra.mxu0 %v209
    %768 = vmatprep.subr.bf16.mxu0 0
    %769 = vmatpush1.bf16.msra.mxu0 %v210
    %770 = vmatprep.subr.bf16.mxu0 0
    %771 = vmatpush1.bf16.msra.mxu0 0
    %772 = vmatprep.subr.bf16.mxu0 0
    %773 = vmatpush1.bf16.msra.mxu0 0
    %774 = vmatprep.subr.bf16.mxu0 0
    %775 = vmatpush1.bf16.msra.mxu0 0
    %776 = vmatprep.subr.bf16.mxu0 0
    %777 = vmatpush1.bf16.msra.mxu0 0
    %778 = vmatprep.subr.bf16.mxu0 0
    %779 = vmatpush1.bf16.msra.mxu0 0
    %780 = vmatprep.subr.bf16.mxu0 0
    %781 = vmatpush1.bf16.msra.mxu0 0
    %782 = vmatprep.subr.bf16.mxu0 0
    %783 = vmatpush1.bf16.msra.mxu0 0
    %784 = vmatprep.subr.bf16.mxu0 0
    %785 = vmatpush1.bf16.msra.mxu0 0
    %786 = vmatprep.subr.bf16.mxu0 0
    %787 = vmatpush1.bf16.msra.mxu0 0
    %788 = vmatprep.subr.bf16.mxu0 0
    %789 = vmatpush1.bf16.msra.mxu0 0
    %790 = vmatprep.subr.bf16.mxu0 0
    %791 = vmatpush1.bf16.msra.mxu0 0
    %792 = vmatprep.subr.bf16.mxu0 0
    %793 = vmatpush1.bf16.msra.mxu0 0
    %794 = vmatprep.subr.bf16.mxu0 0
    %795 = vmatpush1.bf16.msra.mxu0 0
    %796 = vmatprep.subr.bf16.mxu0 0
    %797 = vmatpush1.bf16.msra.mxu0 0
    %798 = vmatprep.mubr.bf16.mxu0 0
    %799 = vmatmul.mubr.bf16.gmra.mrb[0].mxu0 %v764
    %v800 = vpop.f32.mrb[0].mxu0
    %v801 = vadd.f32 %v177, %v800
    %v802 = vpop.f32.mrb[0].mxu0
    %v803 = vpop.f32.mrb[0].mxu0
    %v804 = vpop.f32.mrb[0].mxu0
    %805 = vdwg.mxu0
    %v806 = vpack.c.bf16 %v686, %v686
    %808 = vrot.lane.b32.xlu0 %v806, 32
    %v809 = vpop.permute.xlu0 %808
    %v811 = vsel %vm213, %v809, 0
    %813 = vmatprep.subr.bf16.mxu0 0
    %814 = vmatpush1.bf16.msra.mxu0 %v420
    %815 = vmatprep.subr.bf16.mxu0 0
    %816 = vmatpush1.bf16.msra.mxu0 %v421
    %817 = vmatprep.subr.bf16.mxu0 0
    %818 = vmatpush1.bf16.msra.mxu0 0
    %819 = vmatprep.subr.bf16.mxu0 0
    %820 = vmatpush1.bf16.msra.mxu0 0
    %821 = vmatprep.subr.bf16.mxu0 0
    %822 = vmatpush1.bf16.msra.mxu0 0
    %823 = vmatprep.subr.bf16.mxu0 0
    %824 = vmatpush1.bf16.msra.mxu0 0
    %825 = vmatprep.subr.bf16.mxu0 0
    %826 = vmatpush1.bf16.msra.mxu0 0
    %827 = vmatprep.subr.bf16.mxu0 0
    %828 = vmatpush1.bf16.msra.mxu0 0
    %829 = vmatprep.subr.bf16.mxu0 0
    %830 = vmatpush1.bf16.msra.mxu0 0
    %831 = vmatprep.subr.bf16.mxu0 0
    %832 = vmatpush1.bf16.msra.mxu0 0
    %833 = vmatprep.subr.bf16.mxu0 0
    %834 = vmatpush1.bf16.msra.mxu0 0
    %835 = vmatprep.subr.bf16.mxu0 0
    %836 = vmatpush1.bf16.msra.mxu0 0
    %837 = vmatprep.subr.bf16.mxu0 0
    %838 = vmatpush1.bf16.msra.mxu0 0
    %839 = vmatprep.subr.bf16.mxu0 0
    %840 = vmatpush1.bf16.msra.mxu0 0
    %841 = vmatprep.subr.bf16.mxu0 0
    %842 = vmatpush1.bf16.msra.mxu0 0
    %843 = vmatprep.subr.bf16.mxu0 0
    %844 = vmatpush1.bf16.msra.mxu0 0
    %845 = vmatprep.mubr.bf16.mxu0 0
    %846 = vmatmul.mubr.bf16.gmra.mrb[0].mxu0 %v811
    %v847 = vpop.f32.mrb[0].mxu0
    %v848 = vadd.f32 0.0, %v847
    %v849 = vpop.f32.mrb[0].mxu0
    %v850 = vpop.f32.mrb[0].mxu0
    %v851 = vpop.f32.mrb[0].mxu0
    %852 = vdwg.mxu0
    %v853 = vadd.f32 %v801, %v848
    %v854 = vxor.u32 %v853, 2147483648
    %v855 = vmul.f32 %v854, 1.442695
    %v856 = vpow.pop %v855
    %v857 = vadd.f32 %v856, 1.0
    %v858 = vrcp.pop %v857
    %v859 = vmul.f32 1.0, %v858
    %v860 = vtanh.pop %v853
    %v861 = vmul.f32 %v859, %v680
    %863 = vrot.lane.b32.xlu0 %v860, 64
    %v864 = vpop.permute.xlu0 %863
    %v866 = vmul.f32 %v859, %v864
    %868 = vrot.lane.b32.xlu0 %v866, 32
    %v869 = vpop.permute.xlu0 %868
    %v871 = vadd.f32 %v861, %v869
    %v872 = vtanh.pop %v871
    %874 = vrot.lane.b32.xlu0 %v872, 64
    %v875 = vpop.permute.xlu0 %874
    %v877 = vmul.f32 %v859, %v875
    %878 = vmatprep.subr.bf16.mxu0 0
    %879 = vmatpush1.bf16.msra.mxu0 %v283
    %880 = vmatprep.subr.bf16.mxu0 0
    %881 = vmatpush1.bf16.msra.mxu0 %v284
    %882 = vmatprep.subr.bf16.mxu0 0
    %883 = vmatpush1.bf16.msra.mxu0 0
    %884 = vmatprep.subr.bf16.mxu0 0
    %885 = vmatpush1.bf16.msra.mxu0 0
    %886 = vmatprep.subr.bf16.mxu0 0
    %887 = vmatpush1.bf16.msra.mxu0 0
    %888 = vmatprep.subr.bf16.mxu0 0
    %889 = vmatpush1.bf16.msra.mxu0 0
    %890 = vmatprep.subr.bf16.mxu0 0
    %891 = vmatpush1.bf16.msra.mxu0 0
    %892 = vmatprep.subr.bf16.mxu0 0
    %893 = vmatpush1.bf16.msra.mxu0 0
    %894 = vmatprep.subr.bf16.mxu0 0
    %895 = vmatpush1.bf16.msra.mxu0 0
    %896 = vmatprep.subr.bf16.mxu0 0
    %897 = vmatpush1.bf16.msra.mxu0 0
    %898 = vmatprep.subr.bf16.mxu0 0
    %899 = vmatpush1.bf16.msra.mxu0 0
    %900 = vmatprep.subr.bf16.mxu0 0
    %901 = vmatpush1.bf16.msra.mxu0 0
    %902 = vmatprep.subr.bf16.mxu0 0
    %903 = vmatpush1.bf16.msra.mxu0 0
    %904 = vmatprep.subr.bf16.mxu0 0
    %905 = vmatpush1.bf16.msra.mxu0 0
    %906 = vmatprep.subr.bf16.mxu0 0
    %907 = vmatpush1.bf16.msra.mxu0 0
    %908 = vmatprep.subr.bf16.mxu0 0
    %909 = vmatpush1.bf16.msra.mxu0 0
    %910 = vmatprep.mubr.bf16.mxu0 0
    %911 = vmatmul.mubr.bf16.gmra.mrb[0].mxu0 %v764
    %v912 = vpop.f32.mrb[0].mxu0
    %v913 = vadd.f32 0.0, %v912
    %v914 = vpop.f32.mrb[0].mxu0
    %v915 = vpop.f32.mrb[0].mxu0
    %v916 = vpop.f32.mrb[0].mxu0
    %917 = vdwg.mxu0
    %v918 = vadd.f32 %v157, %v913
    %v919 = vxor.u32 %v918, 2147483648
    %v920 = vmul.f32 %v919, 1.442695
    %v921 = vpow.pop %v920
    %v922 = vadd.f32 %v921, 1.0
    %v923 = vrcp.pop %v922
    %v924 = vmul.f32 1.0, %v923
    %v925 = vtanh.pop %v918
    %v927 = vrot.slane %v751, 6
    %v929 = vmul.f32 %v924, %v927
    %931 = vrot.lane.b32.xlu0 %v925, 64
    %v932 = vpop.permute.xlu0 %931
    %v934 = vmul.f32 %v924, %v932
    %936 = vrot.lane.b32.xlu0 %v934, 32
    %v937 = vpop.permute.xlu0 %936
    %v939 = vadd.f32 %v929, %v937
    %v940 = vtanh.pop %v939
    %942 = vrot.lane.b32.xlu0 %v940, 64
    %v943 = vpop.permute.xlu0 %942
    %v945 = vmul.f32 %v924, %v943
    %v946 = vpack.c.bf16 %v945, %v945
    %948 = vrot.lane.b32.xlu0 %v946, 32
    %v949 = vpop.permute.xlu0 %948
    %v951 = vsel %vm213, %v949, 0
    %953 = vmatprep.subr.bf16.mxu0 0
    %954 = vmatpush1.bf16.msra.mxu0 %v209
    %955 = vmatprep.subr.bf16.mxu0 0
    %956 = vmatpush1.bf16.msra.mxu0 %v210
    %957 = vmatprep.subr.bf16.mxu0 0
    %958 = vmatpush1.bf16.msra.mxu0 0
    %959 = vmatprep.subr.bf16.mxu0 0
    %960 = vmatpush1.bf16.msra.mxu0 0
    %961 = vmatprep.subr.bf16.mxu0 0
    %962 = vmatpush1.bf16.msra.mxu0 0
    %963 = vmatprep.subr.bf16.mxu0 0
    %964 = vmatpush1.bf16.msra.mxu0 0
    %965 = vmatprep.subr.bf16.mxu0 0
    %966 = vmatpush1.bf16.msra.mxu0 0
    %967 = vmatprep.subr.bf16.mxu0 0
    %968 = vmatpush1.bf16.msra.mxu0 0
    %969 = vmatprep.subr.bf16.mxu0 0
    %970 = vmatpush1.bf16.msra.mxu0 0
    %971 = vmatprep.subr.bf16.mxu0 0
    %972 = vmatpush1.bf16.msra.mxu0 0
    %973 = vmatprep.subr.bf16.mxu0 0
    %974 = vmatpush1.bf16.msra.mxu0 0
    %975 = vmatprep.subr.bf16.mxu0 0
    %976 = vmatpush1.bf16.msra.mxu0 0
    %977 = vmatprep.subr.bf16.mxu0 0
    %978 = vmatpush1.bf16.msra.mxu0 0
    %979 = vmatprep.subr.bf16.mxu0 0
    %980 = vmatpush1.bf16.msra.mxu0 0
    %981 = vmatprep.subr.bf16.mxu0 0
    %982 = vmatpush1.bf16.msra.mxu0 0
    %983 = vmatprep.subr.bf16.mxu0 0
    %984 = vmatpush1.bf16.msra.mxu0 0
    %985 = vmatprep.mubr.bf16.mxu0 0
    %986 = vmatmul.mubr.bf16.gmra.mrb[0].mxu0 %v951
    %v987 = vpop.f32.mrb[0].mxu0
    %v988 = vadd.f32 %v177, %v987
    %v989 = vpop.f32.mrb[0].mxu0
    %v990 = vpop.f32.mrb[0].mxu0
    %v991 = vpop.f32.mrb[0].mxu0
    %992 = vdwg.mxu0
    %v993 = vpack.c.bf16 %v877, %v877
    %995 = vrot.lane.b32.xlu0 %v993, 32
    %v996 = vpop.permute.xlu0 %995
    %v998 = vsel %vm213, %v996, 0
    %1000 = vmatprep.subr.bf16.mxu0 0
    %1001 = vmatpush1.bf16.msra.mxu0 %v420
    %1002 = vmatprep.subr.bf16.mxu0 0
    %1003 = vmatpush1.bf16.msra.mxu0 %v421
    %1004 = vmatprep.subr.bf16.mxu0 0
    %1005 = vmatpush1.bf16.msra.mxu0 0
    %1006 = vmatprep.subr.bf16.mxu0 0
    %1007 = vmatpush1.bf16.msra.mxu0 0
    %1008 = vmatprep.subr.bf16.mxu0 0
    %1009 = vmatpush1.bf16.msra.mxu0 0
    %1010 = vmatprep.subr.bf16.mxu0 0
    %1011 = vmatpush1.bf16.msra.mxu0 0
    %1012 = vmatprep.subr.bf16.mxu0 0
    %1013 = vmatpush1.bf16.msra.mxu0 0
    %1014 = vmatprep.subr.bf16.mxu0 0
    %1015 = vmatpush1.bf16.msra.mxu0 0
    %1016 = vmatprep.subr.bf16.mxu0 0
    %1017 = vmatpush1.bf16.msra.mxu0 0
    %1018 = vmatprep.subr.bf16.mxu0 0
    %1019 = vmatpush1.bf16.msra.mxu0 0
    %1020 = vmatprep.subr.bf16.mxu0 0
    %1021 = vmatpush1.bf16.msra.mxu0 0
    %1022 = vmatprep.subr.bf16.mxu0 0
    %1023 = vmatpush1.bf16.msra.mxu0 0
    %1024 = vmatprep.subr.bf16.mxu0 0
    %1025 = vmatpush1.bf16.msra.mxu0 0
    %1026 = vmatprep.subr.bf16.mxu0 0
    %1027 = vmatpush1.bf16.msra.mxu0 0
    %1028 = vmatprep.subr.bf16.mxu0 0
    %1029 = vmatpush1.bf16.msra.mxu0 0
    %1030 = vmatprep.subr.bf16.mxu0 0
    %1031 = vmatpush1.bf16.msra.mxu0 0
    %1032 = vmatprep.mubr.bf16.mxu0 0
    %1033 = vmatmul.mubr.bf16.gmra.mrb[0].mxu0 %v998
    %v1034 = vpop.f32.mrb[0].mxu0
    %v1035 = vadd.f32 0.0, %v1034
    %v1036 = vpop.f32.mrb[0].mxu0
    %v1037 = vpop.f32.mrb[0].mxu0
    %v1038 = vpop.f32.mrb[0].mxu0
    %1039 = vdwg.mxu0
    %v1040 = vadd.f32 %v988, %v1035
    %v1041 = vxor.u32 %v1040, 2147483648
    %v1042 = vmul.f32 %v1041, 1.442695
    %v1043 = vpow.pop %v1042
    %v1044 = vadd.f32 %v1043, 1.0
    %v1045 = vrcp.pop %v1044
    %v1046 = vmul.f32 1.0, %v1045
    %v1047 = vtanh.pop %v1040
    %v1048 = vmul.f32 %v1046, %v871
    %1050 = vrot.lane.b32.xlu0 %v1047, 64
    %v1051 = vpop.permute.xlu0 %1050
    %v1053 = vmul.f32 %v1046, %v1051
    %1055 = vrot.lane.b32.xlu0 %v1053, 32
    %v1056 = vpop.permute.xlu0 %1055
    %v1058 = vadd.f32 %v1048, %v1056
    %v1059 = vtanh.pop %v1058
    %1061 = vrot.lane.b32.xlu0 %v1059, 64
    %v1062 = vpop.permute.xlu0 %1061
    %v1064 = vmul.f32 %v1046, %v1062
    %1065 = vmatprep.subr.bf16.mxu0 0
    %1066 = vmatpush1.bf16.msra.mxu0 %v283
    %1067 = vmatprep.subr.bf16.mxu0 0
    %1068 = vmatpush1.bf16.msra.mxu0 %v284
    %1069 = vmatprep.subr.bf16.mxu0 0
    %1070 = vmatpush1.bf16.msra.mxu0 0
    %1071 = vmatprep.subr.bf16.mxu0 0
    %1072 = vmatpush1.bf16.msra.mxu0 0
    %1073 = vmatprep.subr.bf16.mxu0 0
    %1074 = vmatpush1.bf16.msra.mxu0 0
    %1075 = vmatprep.subr.bf16.mxu0 0
    %1076 = vmatpush1.bf16.msra.mxu0 0
    %1077 = vmatprep.subr.bf16.mxu0 0
    %1078 = vmatpush1.bf16.msra.mxu0 0
    %1079 = vmatprep.subr.bf16.mxu0 0
    %1080 = vmatpush1.bf16.msra.mxu0 0
    %1081 = vmatprep.subr.bf16.mxu0 0
    %1082 = vmatpush1.bf16.msra.mxu0 0
    %1083 = vmatprep.subr.bf16.mxu0 0
    %1084 = vmatpush1.bf16.msra.mxu0 0
    %1085 = vmatprep.subr.bf16.mxu0 0
    %1086 = vmatpush1.bf16.msra.mxu0 0
    %1087 = vmatprep.subr.bf16.mxu0 0
    %1088 = vmatpush1.bf16.msra.mxu0 0
    %1089 = vmatprep.subr.bf16.mxu0 0
    %1090 = vmatpush1.bf16.msra.mxu0 0
    %1091 = vmatprep.subr.bf16.mxu0 0
    %1092 = vmatpush1.bf16.msra.mxu0 0
    %1093 = vmatprep.subr.bf16.mxu0 0
    %1094 = vmatpush1.bf16.msra.mxu0 0
    %1095 = vmatprep.subr.bf16.mxu0 0
    %1096 = vmatpush1.bf16.msra.mxu0 0
    %1097 = vmatprep.mubr.bf16.mxu0 0
    %1098 = vmatmul.mubr.bf16.gmra.mrb[0].mxu0 %v951
    %v1099 = vpop.f32.mrb[0].mxu0
    %v1100 = vadd.f32 0.0, %v1099
    %v1101 = vpop.f32.mrb[0].mxu0
    %v1102 = vpop.f32.mrb[0].mxu0
    %v1103 = vpop.f32.mrb[0].mxu0
    %1104 = vdwg.mxu0
    %v1106 = vrot.slane %v1100, 6
    %v1108 = vadd.f32 %v157, %v1106
    %v1109 = vxor.u32 %v1108, 2147483648
    %v1110 = vmul.f32 %v1109, 1.442695
    %v1111 = vpow.pop %v1110
    %v1112 = vadd.f32 %v1111, 1.0
    %v1113 = vrcp.pop %v1112
    %v1114 = vmul.f32 1.0, %v1113
    %v1115 = vtanh.pop %v1108
    %v1117 = vrot.slane %v939, 6
    %v1119 = vmul.f32 %v1114, %v1117
    %1121 = vrot.lane.b32.xlu0 %v1115, 64
    %v1122 = vpop.permute.xlu0 %1121
    %v1124 = vmul.f32 %v1114, %v1122
    %1126 = vrot.lane.b32.xlu0 %v1124, 32
    %v1127 = vpop.permute.xlu0 %1126
    %v1129 = vadd.f32 %v1119, %v1127
    %v1130 = vtanh.pop %v1129
    %1132 = vrot.lane.b32.xlu0 %v1130, 64
    %v1133 = vpop.permute.xlu0 %1132
    %v1135 = vmul.f32 %v1114, %v1133
    %v1136 = vpack.c.bf16 %v1135, %v1135
    %v1138 = vrot.slane %v1136, 1
    %1139 = vrot.lane.b32.xlu0 %v1138, 32
    %v1140 = vpop.permute.xlu0 %1139
    %v1142 = vsel %vm213, %v1140, 0
    %1144 = vmatprep.subr.bf16.mxu0 0
    %1145 = vmatpush1.bf16.msra.mxu0 %v209
    %1146 = vmatprep.subr.bf16.mxu0 0
    %1147 = vmatpush1.bf16.msra.mxu0 %v210
    %1148 = vmatprep.subr.bf16.mxu0 0
    %1149 = vmatpush1.bf16.msra.mxu0 0
    %1150 = vmatprep.subr.bf16.mxu0 0
    %1151 = vmatpush1.bf16.msra.mxu0 0
    %1152 = vmatprep.subr.bf16.mxu0 0
    %1153 = vmatpush1.bf16.msra.mxu0 0
    %1154 = vmatprep.subr.bf16.mxu0 0
    %1155 = vmatpush1.bf16.msra.mxu0 0
    %1156 = vmatprep.subr.bf16.mxu0 0
    %1157 = vmatpush1.bf16.msra.mxu0 0
    %1158 = vmatprep.subr.bf16.mxu0 0
    %1159 = vmatpush1.bf16.msra.mxu0 0
    %1160 = vmatprep.subr.bf16.mxu0 0
    %1161 = vmatpush1.bf16.msra.mxu0 0
    %1162 = vmatprep.subr.bf16.mxu0 0
    %1163 = vmatpush1.bf16.msra.mxu0 0
    %1164 = vmatprep.subr.bf16.mxu0 0
    %1165 = vmatpush1.bf16.msra.mxu0 0
    %1166 = vmatprep.subr.bf16.mxu0 0
    %1167 = vmatpush1.bf16.msra.mxu0 0
    %1168 = vmatprep.subr.bf16.mxu0 0
    %1169 = vmatpush1.bf16.msra.mxu0 0
    %1170 = vmatprep.subr.bf16.mxu0 0
    %1171 = vmatpush1.bf16.msra.mxu0 0
    %1172 = vmatprep.subr.bf16.mxu0 0
    %1173 = vmatpush1.bf16.msra.mxu0 0
    %1174 = vmatprep.subr.bf16.mxu0 0
    %1175 = vmatpush1.bf16.msra.mxu0 0
    %1176 = vmatprep.mubr.bf16.mxu0 0
    %1177 = vmatmul.mubr.bf16.gmra.mrb[0].mxu0 %v1142
    %v1178 = vpop.f32.mrb[0].mxu0
    %v1179 = vadd.f32 %v177, %v1178
    %v1180 = vpop.f32.mrb[0].mxu0
    %v1181 = vpop.f32.mrb[0].mxu0
    %v1182 = vpop.f32.mrb[0].mxu0
    %1183 = vdwg.mxu0
    %v1184 = vpack.c.bf16 %v1064, %v1064
    %1186 = vrot.lane.b32.xlu0 %v1184, 32
    %v1187 = vpop.permute.xlu0 %1186
    %v1189 = vsel %vm213, %v1187, 0
    %1191 = vmatprep.subr.bf16.mxu0 0
    %1192 = vmatpush1.bf16.msra.mxu0 %v420
    %1193 = vmatprep.subr.bf16.mxu0 0
    %1194 = vmatpush1.bf16.msra.mxu0 %v421
    %1195 = vmatprep.subr.bf16.mxu0 0
    %1196 = vmatpush1.bf16.msra.mxu0 0
    %1197 = vmatprep.subr.bf16.mxu0 0
    %1198 = vmatpush1.bf16.msra.mxu0 0
    %1199 = vmatprep.subr.bf16.mxu0 0
    %1200 = vmatpush1.bf16.msra.mxu0 0
    %1201 = vmatprep.subr.bf16.mxu0 0
    %1202 = vmatpush1.bf16.msra.mxu0 0
    %1203 = vmatprep.subr.bf16.mxu0 0
    %1204 = vmatpush1.bf16.msra.mxu0 0
    %1205 = vmatprep.subr.bf16.mxu0 0
    %1206 = vmatpush1.bf16.msra.mxu0 0
    %1207 = vmatprep.subr.bf16.mxu0 0
    %1208 = vmatpush1.bf16.msra.mxu0 0
    %1209 = vmatprep.subr.bf16.mxu0 0
    %1210 = vmatpush1.bf16.msra.mxu0 0
    %1211 = vmatprep.subr.bf16.mxu0 0
    %1212 = vmatpush1.bf16.msra.mxu0 0
    %1213 = vmatprep.subr.bf16.mxu0 0
    %1214 = vmatpush1.bf16.msra.mxu0 0
    %1215 = vmatprep.subr.bf16.mxu0 0
    %1216 = vmatpush1.bf16.msra.mxu0 0
    %1217 = vmatprep.subr.bf16.mxu0 0
    %1218 = vmatpush1.bf16.msra.mxu0 0
    %1219 = vmatprep.subr.bf16.mxu0 0
    %1220 = vmatpush1.bf16.msra.mxu0 0
    %1221 = vmatprep.subr.bf16.mxu0 0
    %1222 = vmatpush1.bf16.msra.mxu0 0
    %1223 = vmatprep.mubr.bf16.mxu0 0
    %1224 = vmatmul.mubr.bf16.gmra.mrb[0].mxu0 %v1189
    %v1225 = vpop.f32.mrb[0].mxu0
    %v1226 = vadd.f32 0.0, %v1225
    %v1227 = vpop.f32.mrb[0].mxu0
    %v1228 = vpop.f32.mrb[0].mxu0
    %v1229 = vpop.f32.mrb[0].mxu0
    %1230 = vdwg.mxu0
    %v1231 = vadd.f32 %v1179, %v1226
    %v1232 = vxor.u32 %v1231, 2147483648
    %v1233 = vmul.f32 %v1232, 1.442695
    %v1234 = vpow.pop %v1233
    %v1235 = vadd.f32 %v1234, 1.0
    %v1236 = vrcp.pop %v1235
    %v1237 = vmul.f32 1.0, %v1236
    %v1238 = vtanh.pop %v1231
    %v1239 = vmul.f32 %v1237, %v1058
    %1241 = vrot.lane.b32.xlu0 %v1238, 64
    %v1242 = vpop.permute.xlu0 %1241
    %v1244 = vmul.f32 %v1237, %v1242
    %1246 = vrot.lane.b32.xlu0 %v1244, 32
    %v1247 = vpop.permute.xlu0 %1246
    %v1249 = vadd.f32 %v1239, %v1247
    %v1250 = vtanh.pop %v1249
    %1252 = vrot.lane.b32.xlu0 %v1250, 64
    %v1253 = vpop.permute.xlu0 %1252
    %v1255 = vmul.f32 %v1237, %v1253
    %1256 = vmatprep.subr.bf16.mxu0 0
    %1257 = vmatpush1.bf16.msra.mxu0 %v283
    %1258 = vmatprep.subr.bf16.mxu0 0
    %1259 = vmatpush1.bf16.msra.mxu0 %v284
    %1260 = vmatprep.subr.bf16.mxu0 0
    %1261 = vmatpush1.bf16.msra.mxu0 0
    %1262 = vmatprep.subr.bf16.mxu0 0
    %1263 = vmatpush1.bf16.msra.mxu0 0
    %1264 = vmatprep.subr.bf16.mxu0 0
    %1265 = vmatpush1.bf16.msra.mxu0 0
    %1266 = vmatprep.subr.bf16.mxu0 0
    %1267 = vmatpush1.bf16.msra.mxu0 0
    %1268 = vmatprep.subr.bf16.mxu0 0
    %1269 = vmatpush1.bf16.msra.mxu0 0
    %1270 = vmatprep.subr.bf16.mxu0 0
    %1271 = vmatpush1.bf16.msra.mxu0 0
    %1272 = vmatprep.subr.bf16.mxu0 0
    %1273 = vmatpush1.bf16.msra.mxu0 0
    %1274 = vmatprep.subr.bf16.mxu0 0
    %1275 = vmatpush1.bf16.msra.mxu0 0
    %1276 = vmatprep.subr.bf16.mxu0 0
    %1277 = vmatpush1.bf16.msra.mxu0 0
    %1278 = vmatprep.subr.bf16.mxu0 0
    %1279 = vmatpush1.bf16.msra.mxu0 0
    %1280 = vmatprep.subr.bf16.mxu0 0
    %1281 = vmatpush1.bf16.msra.mxu0 0
    %1282 = vmatprep.subr.bf16.mxu0 0
    %1283 = vmatpush1.bf16.msra.mxu0 0
    %1284 = vmatprep.subr.bf16.mxu0 0
    %1285 = vmatpush1.bf16.msra.mxu0 0
    %1286 = vmatprep.subr.bf16.mxu0 0
    %1287 = vmatpush1.bf16.msra.mxu0 0
    %1288 = vmatprep.mubr.bf16.mxu0 0
    %1289 = vmatmul.mubr.bf16.gmra.mrb[0].mxu0 %v1142
    %v1290 = vpop.f32.mrb[0].mxu0
    %v1291 = vadd.f32 0.0, %v1290
    %v1292 = vpop.f32.mrb[0].mxu0
    %v1293 = vpop.f32.mrb[0].mxu0
    %v1294 = vpop.f32.mrb[0].mxu0
    %1295 = vdwg.mxu0
    %v1297 = vrot.slane %v1291, 4
    %v1299 = vadd.f32 %v157, %v1297
    %v1300 = vxor.u32 %v1299, 2147483648
    %v1301 = vmul.f32 %v1300, 1.442695
    %v1302 = vpow.pop %v1301
    %v1303 = vadd.f32 %v1302, 1.0
    %v1304 = vrcp.pop %v1303
    %v1305 = vmul.f32 1.0, %v1304
    %v1306 = vtanh.pop %v1299
    %v1308 = vrot.slane %v1129, 6
    %v1310 = vmul.f32 %v1305, %v1308
    %1312 = vrot.lane.b32.xlu0 %v1306, 64
    %v1313 = vpop.permute.xlu0 %1312
    %v1315 = vmul.f32 %v1305, %v1313
    %1317 = vrot.lane.b32.xlu0 %v1315, 32
    %v1318 = vpop.permute.xlu0 %1317
    %v1320 = vadd.f32 %v1310, %v1318
    %v1321 = vtanh.pop %v1320
    %1323 = vrot.lane.b32.xlu0 %v1321, 64
    %v1324 = vpop.permute.xlu0 %1323
    %v1326 = vmul.f32 %v1305, %v1324
    %v1327 = vpack.c.bf16 %v1326, %v1326
    %v1329 = vrot.slane %v1327, 2
    %1330 = vrot.lane.b32.xlu0 %v1329, 32
    %v1331 = vpop.permute.xlu0 %1330
    %v1333 = vsel %vm213, %v1331, 0
    %1335 = vmatprep.subr.bf16.mxu0 0
    %1336 = vmatpush1.bf16.msra.mxu0 %v209
    %1337 = vmatprep.subr.bf16.mxu0 0
    %1338 = vmatpush1.bf16.msra.mxu0 %v210
    %1339 = vmatprep.subr.bf16.mxu0 0
    %1340 = vmatpush1.bf16.msra.mxu0 0
    %1341 = vmatprep.subr.bf16.mxu0 0
    %1342 = vmatpush1.bf16.msra.mxu0 0
    %1343 = vmatprep.subr.bf16.mxu0 0
    %1344 = vmatpush1.bf16.msra.mxu0 0
    %1345 = vmatprep.subr.bf16.mxu0 0
    %1346 = vmatpush1.bf16.msra.mxu0 0
    %1347 = vmatprep.subr.bf16.mxu0 0
    %1348 = vmatpush1.bf16.msra.mxu0 0
    %1349 = vmatprep.subr.bf16.mxu0 0
    %1350 = vmatpush1.bf16.msra.mxu0 0
    %1351 = vmatprep.subr.bf16.mxu0 0
    %1352 = vmatpush1.bf16.msra.mxu0 0
    %1353 = vmatprep.subr.bf16.mxu0 0
    %1354 = vmatpush1.bf16.msra.mxu0 0
    %1355 = vmatprep.subr.bf16.mxu0 0
    %1356 = vmatpush1.bf16.msra.mxu0 0
    %1357 = vmatprep.subr.bf16.mxu0 0
    %1358 = vmatpush1.bf16.msra.mxu0 0
    %1359 = vmatprep.subr.bf16.mxu0 0
    %1360 = vmatpush1.bf16.msra.mxu0 0
    %1361 = vmatprep.subr.bf16.mxu0 0
    %1362 = vmatpush1.bf16.msra.mxu0 0
    %1363 = vmatprep.subr.bf16.mxu0 0
    %1364 = vmatpush1.bf16.msra.mxu0 0
    %1365 = vmatprep.subr.bf16.mxu0 0
    %1366 = vmatpush1.bf16.msra.mxu0 0
    %1367 = vmatprep.mubr.bf16.mxu0 0
    %1368 = vmatmul.mubr.bf16.gmra.mrb[0].mxu0 %v1333
    %v1369 = vpop.f32.mrb[0].mxu0
    %v1370 = vadd.f32 %v177, %v1369
    %v1371 = vpop.f32.mrb[0].mxu0
    %v1372 = vpop.f32.mrb[0].mxu0
    %v1373 = vpop.f32.mrb[0].mxu0
    %1374 = vdwg.mxu0
    %v1375 = vpack.c.bf16 %v1255, %v1255
    %1377 = vrot.lane.b32.xlu0 %v1375, 32
    %v1378 = vpop.permute.xlu0 %1377
    %v1380 = vsel %vm213, %v1378, 0
    %1382 = vmatprep.subr.bf16.mxu0 0
    %1383 = vmatpush1.bf16.msra.mxu0 %v420
    %1384 = vmatprep.subr.bf16.mxu0 0
    %1385 = vmatpush1.bf16.msra.mxu0 %v421
    %1386 = vmatprep.subr.bf16.mxu0 0
    %1387 = vmatpush1.bf16.msra.mxu0 0
    %1388 = vmatprep.subr.bf16.mxu0 0
    %1389 = vmatpush1.bf16.msra.mxu0 0
    %1390 = vmatprep.subr.bf16.mxu0 0
    %1391 = vmatpush1.bf16.msra.mxu0 0
    %1392 = vmatprep.subr.bf16.mxu0 0
    %1393 = vmatpush1.bf16.msra.mxu0 0
    %1394 = vmatprep.subr.bf16.mxu0 0
    %1395 = vmatpush1.bf16.msra.mxu0 0
    %1396 = vmatprep.subr.bf16.mxu0 0
    %1397 = vmatpush1.bf16.msra.mxu0 0
    %1398 = vmatprep.subr.bf16.mxu0 0
    %1399 = vmatpush1.bf16.msra.mxu0 0
    %1400 = vmatprep.subr.bf16.mxu0 0
    %1401 = vmatpush1.bf16.msra.mxu0 0
    %1402 = vmatprep.subr.bf16.mxu0 0
    %1403 = vmatpush1.bf16.msra.mxu0 0
    %1404 = vmatprep.subr.bf16.mxu0 0
    %1405 = vmatpush1.bf16.msra.mxu0 0
    %1406 = vmatprep.subr.bf16.mxu0 0
    %1407 = vmatpush1.bf16.msra.mxu0 0
    %1408 = vmatprep.subr.bf16.mxu0 0
    %1409 = vmatpush1.bf16.msra.mxu0 0
    %1410 = vmatprep.subr.bf16.mxu0 0
    %1411 = vmatpush1.bf16.msra.mxu0 0
    %1412 = vmatprep.subr.bf16.mxu0 0
    %1413 = vmatpush1.bf16.msra.mxu0 0
    %1414 = vmatprep.mubr.bf16.mxu0 0
    %1415 = vmatmul.mubr.bf16.gmra.mrb[0].mxu0 %v1380
    %v1416 = vpop.f32.mrb[0].mxu0
    %v1417 = vadd.f32 0.0, %v1416
    %v1418 = vpop.f32.mrb[0].mxu0
    %v1419 = vpop.f32.mrb[0].mxu0
    %v1420 = vpop.f32.mrb[0].mxu0
    %1421 = vdwg.mxu0
    %v1422 = vadd.f32 %v1370, %v1417
    %v1423 = vxor.u32 %v1422, 2147483648
    %v1424 = vmul.f32 %v1423, 1.442695
    %v1425 = vpow.pop %v1424
    %v1426 = vadd.f32 %v1425, 1.0
    %v1427 = vrcp.pop %v1426
    %v1428 = vmul.f32 1.0, %v1427
    %v1429 = vtanh.pop %v1422
    %v1430 = vmul.f32 %v1428, %v1249
    %1432 = vrot.lane.b32.xlu0 %v1429, 64
    %v1433 = vpop.permute.xlu0 %1432
    %v1435 = vmul.f32 %v1428, %v1433
    %1437 = vrot.lane.b32.xlu0 %v1435, 32
    %v1438 = vpop.permute.xlu0 %1437
    %v1440 = vadd.f32 %v1430, %v1438
    %v1441 = vtanh.pop %v1440
    %1443 = vrot.lane.b32.xlu0 %v1441, 64
    %v1444 = vpop.permute.xlu0 %1443
    %v1446 = vmul.f32 %v1428, %v1444
    %1447 = vmatprep.subr.bf16.mxu0 0
    %1448 = vmatpush1.bf16.msra.mxu0 %v283
    %1449 = vmatprep.subr.bf16.mxu0 0
    %1450 = vmatpush1.bf16.msra.mxu0 %v284
    %1451 = vmatprep.subr.bf16.mxu0 0
    %1452 = vmatpush1.bf16.msra.mxu0 0
    %1453 = vmatprep.subr.bf16.mxu0 0
    %1454 = vmatpush1.bf16.msra.mxu0 0
    %1455 = vmatprep.subr.bf16.mxu0 0
    %1456 = vmatpush1.bf16.msra.mxu0 0
    %1457 = vmatprep.subr.bf16.mxu0 0
    %1458 = vmatpush1.bf16.msra.mxu0 0
    %1459 = vmatprep.subr.bf16.mxu0 0
    %1460 = vmatpush1.bf16.msra.mxu0 0
    %1461 = vmatprep.subr.bf16.mxu0 0
    %1462 = vmatpush1.bf16.msra.mxu0 0
    %1463 = vmatprep.subr.bf16.mxu0 0
    %1464 = vmatpush1.bf16.msra.mxu0 0
    %1465 = vmatprep.subr.bf16.mxu0 0
    %1466 = vmatpush1.bf16.msra.mxu0 0
    %1467 = vmatprep.subr.bf16.mxu0 0
    %1468 = vmatpush1.bf16.msra.mxu0 0
    %1469 = vmatprep.subr.bf16.mxu0 0
    %1470 = vmatpush1.bf16.msra.mxu0 0
    %1471 = vmatprep.subr.bf16.mxu0 0
    %1472 = vmatpush1.bf16.msra.mxu0 0
    %1473 = vmatprep.subr.bf16.mxu0 0
    %1474 = vmatpush1.bf16.msra.mxu0 0
    %1475 = vmatprep.subr.bf16.mxu0 0
    %1476 = vmatpush1.bf16.msra.mxu0 0
    %1477 = vmatprep.subr.bf16.mxu0 0
    %1478 = vmatpush1.bf16.msra.mxu0 0
    %1479 = vmatprep.mubr.bf16.mxu0 0
    %1480 = vmatmul.mubr.bf16.gmra.mrb[0].mxu0 %v1333
    %v1481 = vpop.f32.mrb[0].mxu0
    %v1482 = vadd.f32 0.0, %v1481
    %v1483 = vpop.f32.mrb[0].mxu0
    %v1484 = vpop.f32.mrb[0].mxu0
    %v1485 = vpop.f32.mrb[0].mxu0
    %1486 = vdwg.mxu0
    %v1488 = vrot.slane %v1482, 2
    %v1490 = vadd.f32 %v157, %v1488
    %v1491 = vxor.u32 %v1490, 2147483648
    %v1492 = vmul.f32 %v1491, 1.442695
    %v1493 = vpow.pop %v1492
    %v1494 = vadd.f32 %v1493, 1.0
    %v1495 = vrcp.pop %v1494
    %v1496 = vmul.f32 1.0, %v1495
    %v1497 = vtanh.pop %v1490
    %v1499 = vrot.slane %v1320, 6
    %v1501 = vmul.f32 %v1496, %v1499
    %1503 = vrot.lane.b32.xlu0 %v1497, 64
    %v1504 = vpop.permute.xlu0 %1503
    %v1506 = vmul.f32 %v1496, %v1504
    %1508 = vrot.lane.b32.xlu0 %v1506, 32
    %v1509 = vpop.permute.xlu0 %1508
    %v1511 = vadd.f32 %v1501, %v1509
    %v1512 = vtanh.pop %v1511
    %1514 = vrot.lane.b32.xlu0 %v1512, 64
    %v1515 = vpop.permute.xlu0 %1514
    %v1517 = vmul.f32 %v1496, %v1515
    %v1518 = vpack.c.bf16 %v1517, %v1517
    %v1520 = vrot.slane %v1518, 3
    %1521 = vrot.lane.b32.xlu0 %v1520, 32
    %v1522 = vpop.permute.xlu0 %1521
    %v1524 = vsel %vm213, %v1522, 0
    %1526 = vmatprep.subr.bf16.mxu0 0
    %1527 = vmatpush1.bf16.msra.mxu0 %v209
    %1528 = vmatprep.subr.bf16.mxu0 0
    %1529 = vmatpush1.bf16.msra.mxu0 %v210
    %1530 = vmatprep.subr.bf16.mxu0 0
    %1531 = vmatpush1.bf16.msra.mxu0 0
    %1532 = vmatprep.subr.bf16.mxu0 0
    %1533 = vmatpush1.bf16.msra.mxu0 0
    %1534 = vmatprep.subr.bf16.mxu0 0
    %1535 = vmatpush1.bf16.msra.mxu0 0
    %1536 = vmatprep.subr.bf16.mxu0 0
    %1537 = vmatpush1.bf16.msra.mxu0 0
    %1538 = vmatprep.subr.bf16.mxu0 0
    %1539 = vmatpush1.bf16.msra.mxu0 0
    %1540 = vmatprep.subr.bf16.mxu0 0
    %1541 = vmatpush1.bf16.msra.mxu0 0
    %1542 = vmatprep.subr.bf16.mxu0 0
    %1543 = vmatpush1.bf16.msra.mxu0 0
    %1544 = vmatprep.subr.bf16.mxu0 0
    %1545 = vmatpush1.bf16.msra.mxu0 0
    %1546 = vmatprep.subr.bf16.mxu0 0
    %1547 = vmatpush1.bf16.msra.mxu0 0
    %1548 = vmatprep.subr.bf16.mxu0 0
    %1549 = vmatpush1.bf16.msra.mxu0 0
    %1550 = vmatprep.subr.bf16.mxu0 0
    %1551 = vmatpush1.bf16.msra.mxu0 0
    %1552 = vmatprep.subr.bf16.mxu0 0
    %1553 = vmatpush1.bf16.msra.mxu0 0
    %1554 = vmatprep.subr.bf16.mxu0 0
    %1555 = vmatpush1.bf16.msra.mxu0 0
    %1556 = vmatprep.subr.bf16.mxu0 0
    %1557 = vmatpush1.bf16.msra.mxu0 0
    %1558 = vmatprep.mubr.bf16.mxu0 0
    %1559 = vmatmul.mubr.bf16.gmra.mrb[0].mxu0 %v1524
    %v1560 = vpop.f32.mrb[0].mxu0
    %v1561 = vadd.f32 %v177, %v1560
    %v1562 = vpop.f32.mrb[0].mxu0
    %v1563 = vpop.f32.mrb[0].mxu0
    %v1564 = vpop.f32.mrb[0].mxu0
    %1565 = vdwg.mxu0
    %v1566 = vpack.c.bf16 %v1446, %v1446
    %1568 = vrot.lane.b32.xlu0 %v1566, 32
    %v1569 = vpop.permute.xlu0 %1568
    %v1571 = vsel %vm213, %v1569, 0
    %1573 = vmatprep.subr.bf16.mxu0 0
    %1574 = vmatpush1.bf16.msra.mxu0 %v420
    %1575 = vmatprep.subr.bf16.mxu0 0
    %1576 = vmatpush1.bf16.msra.mxu0 %v421
    %1577 = vmatprep.subr.bf16.mxu0 0
    %1578 = vmatpush1.bf16.msra.mxu0 0
    %1579 = vmatprep.subr.bf16.mxu0 0
    %1580 = vmatpush1.bf16.msra.mxu0 0
    %1581 = vmatprep.subr.bf16.mxu0 0
    %1582 = vmatpush1.bf16.msra.mxu0 0
    %1583 = vmatprep.subr.bf16.mxu0 0
    %1584 = vmatpush1.bf16.msra.mxu0 0
    %1585 = vmatprep.subr.bf16.mxu0 0
    %1586 = vmatpush1.bf16.msra.mxu0 0
    %1587 = vmatprep.subr.bf16.mxu0 0
    %1588 = vmatpush1.bf16.msra.mxu0 0
    %1589 = vmatprep.subr.bf16.mxu0 0
    %1590 = vmatpush1.bf16.msra.mxu0 0
    %1591 = vmatprep.subr.bf16.mxu0 0
    %1592 = vmatpush1.bf16.msra.mxu0 0
    %1593 = vmatprep.subr.bf16.mxu0 0
    %1594 = vmatpush1.bf16.msra.mxu0 0
    %1595 = vmatprep.subr.bf16.mxu0 0
    %1596 = vmatpush1.bf16.msra.mxu0 0
    %1597 = vmatprep.subr.bf16.mxu0 0
    %1598 = vmatpush1.bf16.msra.mxu0 0
    %1599 = vmatprep.subr.bf16.mxu0 0
    %1600 = vmatpush1.bf16.msra.mxu0 0
    %1601 = vmatprep.subr.bf16.mxu0 0
    %1602 = vmatpush1.bf16.msra.mxu0 0
    %1603 = vmatprep.subr.bf16.mxu0 0
    %1604 = vmatpush1.bf16.msra.mxu0 0
    %1605 = vmatprep.mubr.bf16.mxu0 0
    %1606 = vmatmul.mubr.bf16.gmra.mrb[0].mxu0 %v1571
    %v1607 = vpop.f32.mrb[0].mxu0
    %v1608 = vadd.f32 0.0, %v1607
    %v1609 = vpop.f32.mrb[0].mxu0
    %v1610 = vpop.f32.mrb[0].mxu0
    %v1611 = vpop.f32.mrb[0].mxu0
    %1612 = vdwg.mxu0
    %v1613 = vadd.f32 %v1561, %v1608
    %v1614 = vxor.u32 %v1613, 2147483648
    %v1615 = vmul.f32 %v1614, 1.442695
    %v1616 = vpow.pop %v1615
    %v1617 = vadd.f32 %v1616, 1.0
    %v1618 = vrcp.pop %v1617
    %v1619 = vmul.f32 1.0, %v1618
    %v1620 = vtanh.pop %v1613
    %v1621 = vmul.f32 %v1619, %v1440
    %1623 = vrot.lane.b32.xlu0 %v1620, 64
    %v1624 = vpop.permute.xlu0 %1623
    %v1626 = vmul.f32 %v1619, %v1624
    %1628 = vrot.lane.b32.xlu0 %v1626, 32
    %v1629 = vpop.permute.xlu0 %1628
    %v1631 = vadd.f32 %v1621, %v1629
    %v1632 = vtanh.pop %v1631
    %1634 = vrot.lane.b32.xlu0 %v1632, 64
    %v1635 = vpop.permute.xlu0 %1634
    %v1637 = vmul.f32 %v1619, %v1635
    %v1638 = vpack.c.bf16 %v1637, %v1637
    %v1639 = vld [vmem:[%s7] sm:$0xf]
    %v1640 = vld [vmem:[%s7 + $0x4] sm:$0xf]
    %v1641 = vld [vmem:[%s7 + $0x8] sm:$0xf]
    %v1642 = vld [vmem:[%s7 + $0xc] sm:$0xf]
    %v1643 = vld [vmem:[%s8] sm:$0x1]
    %v1645 = vlaneseq
    %v1646 = vshrl.u32 %v1645, 7
    %v1647 = vsub.s32 0, %v1646
    %v1648 = vrot.slane %v1643, %v1647
    %1651 = vrot.lane.b32.xlu0 %v1638, 32
    %v1652 = vpop.permute.xlu0 %1651
    %v1657 = vunpack.c.l.b16 %v1639
    %v1658 = vunpack.c.l.b16 %v1640
    %v1659 = vunpack.c.l.b16 %v1641
    %v1660 = vunpack.c.l.b16 %v1642
    %v1661 = vpack.c.b16 %v1658, %v1657
    %v1662 = vpack.c.b16 %v1660, %v1659
    %v1666 = vsel %vm213, %v1652, 0
    %1668 = vmatprep.subr.bf16.mxu0 0
    %1669 = vmatpush1.bf16.msra.mxu0 %v1661
    %1670 = vmatprep.subr.bf16.mxu0 0
    %1671 = vmatpush1.bf16.msra.mxu0 %v1662
    %1672 = vmatprep.subr.bf16.mxu0 0
    %1673 = vmatpush1.bf16.msra.mxu0 0
    %1674 = vmatprep.subr.bf16.mxu0 0
    %1675 = vmatpush1.bf16.msra.mxu0 0
    %1676 = vmatprep.subr.bf16.mxu0 0
    %1677 = vmatpush1.bf16.msra.mxu0 0
    %1678 = vmatprep.subr.bf16.mxu0 0
    %1679 = vmatpush1.bf16.msra.mxu0 0
    %1680 = vmatprep.subr.bf16.mxu0 0
    %1681 = vmatpush1.bf16.msra.mxu0 0
    %1682 = vmatprep.subr.bf16.mxu0 0
    %1683 = vmatpush1.bf16.msra.mxu0 0
    %1684 = vmatprep.subr.bf16.mxu0 0
    %1685 = vmatpush1.bf16.msra.mxu0 0
    %1686 = vmatprep.subr.bf16.mxu0 0
    %1687 = vmatpush1.bf16.msra.mxu0 0
    %1688 = vmatprep.subr.bf16.mxu0 0
    %1689 = vmatpush1.bf16.msra.mxu0 0
    %1690 = vmatprep.subr.bf16.mxu0 0
    %1691 = vmatpush1.bf16.msra.mxu0 0
    %1692 = vmatprep.subr.bf16.mxu0 0
    %1693 = vmatpush1.bf16.msra.mxu0 0
    %1694 = vmatprep.subr.bf16.mxu0 0
    %1695 = vmatpush1.bf16.msra.mxu0 0
    %1696 = vmatprep.subr.bf16.mxu0 0
    %1697 = vmatpush1.bf16.msra.mxu0 0
    %1698 = vmatprep.subr.bf16.mxu0 0
    %1699 = vmatpush1.bf16.msra.mxu0 0
    %1700 = vmatprep.mubr.bf16.mxu0 0
    %1701 = vmatmul.mubr.bf16.gmra.mrb[0].mxu0 %v1666
    %v1702 = vpop.f32.mrb[0].mxu0
    %v1703 = vadd.f32 %v1648, %v1702
    %v1704 = vpop.f32.mrb[0].mxu0
    %v1705 = vpop.f32.mrb[0].mxu0
    %v1706 = vpop.f32.mrb[0].mxu0
    %1707 = vdwg.mxu0
    %1708 = vst [vmem:[#allocation11] sm:$0x3] %v1703
    // Predicated region
    $region58: #{tpu_custom_call.1} parent=1 // pred_check
      _
    $region59: #{tpu_custom_call.1} parent=1 // pred_check_branch
      %1710 = sbr.rel (0) target = $region61
    $region60: #{tpu_custom_call.1} parent=1 // pred_region
      %s1712 = ssub.s32 32, 32
      %1713 = vsyncadd [#allocation4], %s1712
      %s1715 = sshll.u32 [#allocation11], 4
      %s1716 = int_to_ptr.vmem [resolvable:$true] %s1715
      %1718 = dma.vmem_to_hbm [thread:$0]  %s1716, 32, %s9, [#allocation4]
    $region61: #{tpu_custom_call.1} parent=1 // pred_fallthru
      _
    // Predicated region
    $region62: #{tpu_custom_call.1} parent=1 // pred_check
      _
    $region63: #{tpu_custom_call.1} parent=1 // pred_check_branch
      %1720 = sbr.rel (0) target = $region65
    $region64: #{tpu_custom_call.1} parent=1 // pred_region
      %1721 = dma.done [#allocation4], 32
    $region65: #{tpu_custom_call.1} parent=1 // pred_fallthru
      _
    %1722 = vsyncpa [#allocation3], 1
    %1723 = vsyncpa [#allocation6], 1
    %1724 = vsyncpa [#allocation9], 1
    %1725 = vsyncpa [#allocation4], 1

</llo_original>
